<compile_context>
chip_gen: v5e
topology: v5e:2x2
jax: 0.10.0
libtpu: 0.0.40
codegen_flags: <defaults>
</compile_context>

<pallas_src>
import functools
import math

import jax
import jax.numpy as jnp
from jax.experimental import pallas as pl
from jax.experimental.pallas import tpu as pltpu


# 32 MiB scoped VMEM: >= default on v5e (16), == default on v6e/v7x, well
# under v7x's 64 MiB physical budget.  Actual use here is < 2 MiB.
_VMEM_LIMIT = 32 * 1024 * 1024

_GELU_C = math.sqrt(2.0 / math.pi)  # hoisted constant (GPT-2 "gelu_new")


def _layernorm(x, g, b, eps=1e-5):
    """f32 LayerNorm over the last axis (VPU/EUP, v5e-safe f32)."""
    mu = jnp.mean(x, axis=-1, keepdims=True)
    var = jnp.mean(jnp.square(x - mu), axis=-1, keepdims=True)
    return (x - mu) * jax.lax.rsqrt(var + eps) * g + b


def _gelu_new(x):
    """GPT-2 tanh-approximation GELU, kept in f32."""
    return 0.5 * x * (1.0 + jnp.tanh(_GELU_C * (x + 0.044715 * x * x * x)))


# --------------------- fully fused forward-pass kernel ----------------------


def _sonnet_gpt_kernel(
    # inputs
    h_ref, mask_ref,
    ln1_g_ref, ln1_b_ref, attn_w_ref, attn_b_ref, proj_w_ref, proj_b_ref,
    ln2_g_ref, ln2_b_ref, fc_w_ref, fc_b_ref, fc_proj_w_ref, fc_proj_b_ref,
    ln_f_g_ref, ln_f_b_ref, lm_w_ref,
    # outputs
    o_ref,
    # scratch
    hf_ref,
    *, n_head, head_dim, n_layer):
    """One (batch b, layer l) grid step: full transformer block on sequence b;
    on the last layer also the final LN + weight-tied LM head."""
    l = pl.program_id(1)
    T = hf_ref.shape[0]
    D = n_head * head_dim

    # Layer 0: seed the VMEM-resident residual stream from the embeddings.
    @pl.when(l == 0)
    def _():
        hf_ref[...] = h_ref[0]

    hf = hf_ref[...]                                            # (T, D) f32

    # ---------------- attention block: h = h + proj(SDPA(LN1(h))) -----------
    xn = _layernorm(hf, ln1_g_ref[0], ln1_b_ref[0])
    qkv = jnp.dot(xn.astype(jnp.bfloat16), attn_w_ref[0],
                  preferred_element_type=jnp.float32) + attn_b_ref[0]  # (T, 3D)

    scale = 1.0 / math.sqrt(head_dim)
    # Head-major (H, T, Dh) so all heads run as one batched MXU contraction.
    q = jnp.stack([qkv[:, h * head_dim:(h + 1) * head_dim]
                   for h in range(n_head)], axis=0) * scale            # (H,T,Dh)
    k = jnp.stack([qkv[:, D + h * head_dim:D + (h + 1) * head_dim]
                   for h in range(n_head)], axis=0)
    v = jnp.stack([qkv[:, 2 * D + h * head_dim:2 * D + (h + 1) * head_dim]
                   for h in range(n_head)], axis=0)

    # causal + key-padding mask, built once per step.
    row = jax.lax.broadcasted_iota(jnp.int32, (1, T, T), 1)
    col = jax.lax.broadcasted_iota(jnp.int32, (1, T, T), 2)
    keep = jnp.logical_and(col <= row, mask_ref[...] > 0.5)            # (1,T,T)

    s = jnp.einsum("hqd,hkd->hqk", q.astype(jnp.bfloat16), k.astype(jnp.bfloat16),
                   preferred_element_type=jnp.float32)                 # (H,T,T)
    s = jnp.where(keep, s, -1e30)
    s = s - jnp.max(s, axis=-1, keepdims=True)
    p = jnp.exp(s)
    p = p * pl.reciprocal(jnp.sum(p, axis=-1, keepdims=True), approx=True)
    ctx = jnp.einsum("hqk,hkd->hqd", p.astype(jnp.bfloat16), v.astype(jnp.bfloat16),
                     preferred_element_type=jnp.float32)               # (H,T,Dh)
    ctx = jnp.concatenate([ctx[h] for h in range(n_head)], axis=-1)    # (T, D)

    proj = jnp.dot(ctx.astype(jnp.bfloat16), proj_w_ref[0],
                   preferred_element_type=jnp.float32) + proj_b_ref[0]
    hf = hf + proj

    # ---------------- MLP block: h = h + proj(gelu(fc(LN2(h)))) -------------
    xn2 = _layernorm(hf, ln2_g_ref[0], ln2_b_ref[0])
    fc = jnp.dot(xn2.astype(jnp.bfloat16), fc_w_ref[0],
                 preferred_element_type=jnp.float32) + fc_b_ref[0]     # (T, 4D)
    fc = _gelu_new(fc)
    mlp = jnp.dot(fc.astype(jnp.bfloat16), fc_proj_w_ref[0],
                  preferred_element_type=jnp.float32) + fc_proj_b_ref[0]
    hf = hf + mlp

    hf_ref[...] = hf  # carry residual stream in VMEM to the next layer step

    # ---------------- final LN + weight-tied LM head (last layer only) ------
    @pl.when(l == n_layer - 1)
    def _():
        xf = _layernorm(hf, ln_f_g_ref[...], ln_f_b_ref[...])
        logits = jnp.dot(xf.astype(jnp.bfloat16), lm_w_ref[...],
                         preferred_element_type=jnp.float32)           # (T, V)
        o_ref[0] = logits.astype(o_ref.dtype)                          # lane-dense


# ----------------------------- model definition ----------------------------

CONFIG = dict(
    vocab=256,       # multiple of 128 -> lane-dense LM head stores
    d_model=128,     # multiple of 128 -> lane-dense activations
    n_head=4,
    n_layer=2,
    max_pos=64,
    lora_rank=8,
    lora_alpha=16.0,
)


def init_params(key, cfg):
    """Training-style parameters (f32, separate LoRA A/B adapters)."""
    V, D, L = cfg["vocab"], cfg["d_model"], cfg["n_layer"]
    R = cfg["lora_rank"]
    keys = iter(jax.random.split(key, 4 + 10 * L))

    def nrm(shape, std=0.02):
        return (std * jax.random.normal(next(keys), shape)).astype(jnp.float32)

    params = {
        "wte": nrm((V, D)),
        "wpe": nrm((cfg["max_pos"], D)),
        "ln_f_g": jnp.ones((1, D), jnp.float32),
        "ln_f_b": jnp.zeros((1, D), jnp.float32),
        "layers": [],
    }
    for _ in range(L):
        params["layers"].append({
            "ln1_g": jnp.ones((1, D), jnp.float32),
            "ln1_b": jnp.zeros((1, D), jnp.float32),
            "attn_w": nrm((D, 3 * D)),
            "attn_b": jnp.zeros((1, 3 * D), jnp.float32),
            "attn_lora_a": nrm((D, R)),
            "attn_lora_b": nrm((R, 3 * D), std=0.01),
            "proj_w": nrm((D, D)),
            "proj_b": jnp.zeros((1, D), jnp.float32),
            "proj_lora_a": nrm((D, R)),
            "proj_lora_b": nrm((R, D), std=0.01),
            "ln2_g": jnp.ones((1, D), jnp.float32),
            "ln2_b": jnp.zeros((1, D), jnp.float32),
            "fc_w": nrm((D, 4 * D)),
            "fc_b": jnp.zeros((1, 4 * D), jnp.float32),
            "fc_proj_w": nrm((4 * D, D)),
            "fc_proj_b": jnp.zeros((1, D), jnp.float32),
        })
    return params


def prepare_inference_params(params, cfg):
    """One-time prep: fold frozen LoRA into base weights (== base +
    scale*(x@A)@B to bf16 tolerance), stack per-layer params along a leading
    layer axis for BlockSpec streaming, cast MXU weights to bf16 and
    pre-transpose the weight-tied LM head."""
    scale = cfg["lora_alpha"] / cfg["lora_rank"]
    layers = params["layers"]

    def stack(name):
        return jnp.stack([lyr[name] for lyr in layers], axis=0)

    attn_w = jnp.stack(
        [lyr["attn_w"] + scale * (lyr["attn_lora_a"] @ lyr["attn_lora_b"])
         for lyr in layers], axis=0)
    proj_w = jnp.stack(
        [lyr["proj_w"] + scale * (lyr["proj_lora_a"] @ lyr["proj_lora_b"])
         for lyr in layers], axis=0)

    return {
        "wte": params["wte"],                                   # f32 for gather
        "wpe": params["wpe"],
        "ln_f_g": params["ln_f_g"], "ln_f_b": params["ln_f_b"],
        "lm_w": jnp.transpose(params["wte"]).astype(jnp.bfloat16),   # (D, V)
        "ln1_g": stack("ln1_g"), "ln1_b": stack("ln1_b"),            # (L,1,D)
        "attn_w": attn_w.astype(jnp.bfloat16), "attn_b": stack("attn_b"),
        "proj_w": proj_w.astype(jnp.bfloat16), "proj_b": stack("proj_b"),
        "ln2_g": stack("ln2_g"), "ln2_b": stack("ln2_b"),
        "fc_w": stack("fc_w").astype(jnp.bfloat16), "fc_b": stack("fc_b"),
        "fc_proj_w": stack("fc_proj_w").astype(jnp.bfloat16),
        "fc_proj_b": stack("fc_proj_b"),
    }


def sonnet_gpt_forward(ip, input_ids, attention_mask, cfg):
    """Returns logits [B, T, vocab] — same contract as SonnetGPT.forward."""
    B, T = input_ids.shape
    D, H, V, L = cfg["d_model"], cfg["n_head"], cfg["vocab"], cfg["n_layer"]

    # embeddings (glue: data-dependent gather + add)
    h = ip["wte"][input_ids] + ip["wpe"][jnp.arange(T)][None, :, :]   # (B,T,D)
    mask3 = attention_mask.astype(jnp.float32).reshape(B, 1, T)

    kernel = functools.partial(_sonnet_gpt_kernel, n_head=H,
                               head_dim=D // H, n_layer=L)

    def layer_spec(arr):   # stream layer l's slice, constant along batch axis
        nd = arr.ndim
        return pl.BlockSpec((1,) + arr.shape[1:],
                            lambda b, l, _nd=nd: (l,) + (0,) * (_nd - 1))

    in_specs = [
        pl.BlockSpec((1, T, D), lambda b, l: (b, 0, 0)),              # h
        pl.BlockSpec((1, 1, T), lambda b, l: (b, 0, 0)),              # mask
        layer_spec(ip["ln1_g"]), layer_spec(ip["ln1_b"]),
        layer_spec(ip["attn_w"]), layer_spec(ip["attn_b"]),
        layer_spec(ip["proj_w"]), layer_spec(ip["proj_b"]),
        layer_spec(ip["ln2_g"]), layer_spec(ip["ln2_b"]),
        layer_spec(ip["fc_w"]), layer_spec(ip["fc_b"]),
        layer_spec(ip["fc_proj_w"]), layer_spec(ip["fc_proj_b"]),
        pl.BlockSpec((1, D), lambda b, l: (0, 0)),                    # ln_f_g
        pl.BlockSpec((1, D), lambda b, l: (0, 0)),                    # ln_f_b
        pl.BlockSpec((D, V), lambda b, l: (0, 0)),                    # lm_w
    ]

    logits = pl.pallas_call(
        kernel,
        out_shape=jax.ShapeDtypeStruct((B, T, V), jnp.float32),
        grid=(B, L),
        in_specs=in_specs,
        out_specs=pl.BlockSpec((1, T, V), lambda b, l: (b, 0, 0)),
        scratch_shapes=[pltpu.VMEM((T, D), jnp.float32)],             # residual
        compiler_params=pltpu.CompilerParams(
            dimension_semantics=("parallel", "arbitrary"),
            vmem_limit_bytes=_VMEM_LIMIT),
    )(h, mask3,
      ip["ln1_g"], ip["ln1_b"], ip["attn_w"], ip["attn_b"],
      ip["proj_w"], ip["proj_b"], ip["ln2_g"], ip["ln2_b"],
      ip["fc_w"], ip["fc_b"], ip["fc_proj_w"], ip["fc_proj_b"],
      ip["ln_f_g"], ip["ln_f_b"], ip["lm_w"])
    return logits


# ---------------------------------- main ------------------------------------

if __name__ == "__main__":
    key = jax.random.PRNGKey(0)
    pkey, ikey = jax.random.split(key)

    cfg = CONFIG
    params = init_params(pkey, cfg)
    iparams = prepare_inference_params(params, cfg)

    B, T = 2, 16
    input_ids = jax.random.randint(ikey, (B, T), 0, cfg["vocab"], dtype=jnp.int32)
    # last four tokens of sequence 1 are padding
    attention_mask = jnp.concatenate(
        [jnp.ones((1, T), jnp.int32),
         jnp.concatenate([jnp.ones((1, T - 4), jnp.int32),
                          jnp.zeros((1, 4), jnp.int32)], axis=1)], axis=0)

    fwd = jax.jit(functools.partial(sonnet_gpt_forward, cfg=cfg))
    logits = fwd(iparams, input_ids, attention_mask)
    jax.block_until_ready(logits)

    assert logits.shape == (B, T, cfg["vocab"])
    assert bool(jnp.all(jnp.isfinite(logits)))
    print("KERNEL_OK")
</pallas_src>

<mosaic_0001>
module attributes {stable_mosaic.version = 11 : i64} {
  func.func @_sonnet_gpt_kernel(%arg0: i32, %arg1: i32, %arg2: memref<1x16x128xf32, #tpu.memory_space<vmem>>, %arg3: memref<1x1x16xf32, #tpu.memory_space<vmem>>, %arg4: memref<1x1x128xf32, #tpu.memory_space<vmem>>, %arg5: memref<1x1x128xf32, #tpu.memory_space<vmem>>, %arg6: memref<1x128x384xbf16, #tpu.memory_space<vmem>>, %arg7: memref<1x1x384xf32, #tpu.memory_space<vmem>>, %arg8: memref<1x128x128xbf16, #tpu.memory_space<vmem>>, %arg9: memref<1x1x128xf32, #tpu.memory_space<vmem>>, %arg10: memref<1x1x128xf32, #tpu.memory_space<vmem>>, %arg11: memref<1x1x128xf32, #tpu.memory_space<vmem>>, %arg12: memref<1x128x512xbf16, #tpu.memory_space<vmem>>, %arg13: memref<1x1x512xf32, #tpu.memory_space<vmem>>, %arg14: memref<1x512x128xbf16, #tpu.memory_space<vmem>>, %arg15: memref<1x1x128xf32, #tpu.memory_space<vmem>>, %arg16: memref<1x128xf32, #tpu.memory_space<vmem>>, %arg17: memref<1x128xf32, #tpu.memory_space<vmem>>, %arg18: memref<128x256xbf16, #tpu.memory_space<vmem>>, %arg19: memref<1x16x256xf32, #tpu.memory_space<vmem>>, %arg20: memref<16x128xf32, #tpu.memory_space<vmem>>) attributes {dimension_semantics = [#tpu.dimension_semantics<parallel>, #tpu.dimension_semantics<arbitrary>], iteration_bounds = array<i64: 2, 2>, scalar_prefetch = 0 : i64, scratch_operands = 1 : i64, tpu.core_type = #tpu.core_type<tc>, window_params = [{transform_indices = @transform_0, window_bounds = array<i64: 1, 16, 128>}, {transform_indices = @transform_1, window_bounds = array<i64: 1, 1, 16>}, {transform_indices = @transform_2, window_bounds = array<i64: 1, 1, 128>}, {transform_indices = @transform_3, window_bounds = array<i64: 1, 1, 128>}, {transform_indices = @transform_4, window_bounds = array<i64: 1, 128, 384>}, {transform_indices = @transform_5, window_bounds = array<i64: 1, 1, 384>}, {transform_indices = @transform_6, window_bounds = array<i64: 1, 128, 128>}, {transform_indices = @transform_7, window_bounds = array<i64: 1, 1, 128>}, {transform_indices = @transform_8, window_bounds = array<i64: 1, 1, 128>}, {transform_indices = @transform_9, window_bounds = array<i64: 1, 1, 128>}, {transform_indices = @transform_10, window_bounds = array<i64: 1, 128, 512>}, {transform_indices = @transform_11, window_bounds = array<i64: 1, 1, 512>}, {transform_indices = @transform_12, window_bounds = array<i64: 1, 512, 128>}, {transform_indices = @transform_13, window_bounds = array<i64: 1, 1, 128>}, {pipeline_mode = #tpu.pipeline_mode<synchronous>, transform_indices = @transform_14, window_bounds = array<i64: 1, 128>}, {pipeline_mode = #tpu.pipeline_mode<synchronous>, transform_indices = @transform_15, window_bounds = array<i64: 1, 128>}, {pipeline_mode = #tpu.pipeline_mode<synchronous>, transform_indices = @transform_16, window_bounds = array<i64: 128, 256>}, {transform_indices = @transform_17, window_bounds = array<i64: 1, 16, 256>}]} {
    %c0_i32 = arith.constant 0 : i32
    %0 = arith.cmpi eq, %arg1, %c0_i32 : i32
    %1 = arith.extui %0 : i1 to i32
    %c0_i32_0 = arith.constant 0 : i32
    %2 = arith.cmpi ne, %1, %c0_i32_0 : i32
    scf.if %2 {
      %c0_68 = arith.constant 0 : index
      %c0_69 = arith.constant 0 : index
      %c0_70 = arith.constant 0 : index
      %173 = vector.load %arg2[%c0_68, %c0_69, %c0_70] : memref<1x16x128xf32, #tpu.memory_space<vmem>>, vector<1x16x128xf32>
      %174 = vector.shape_cast %173 : vector<1x16x128xf32> to vector<16x128xf32>
      %c0_71 = arith.constant 0 : index
      %c0_72 = arith.constant 0 : index
      %175 = vector.load %arg20[%c0_71, %c0_72] : memref<16x128xf32, #tpu.memory_space<vmem>>, vector<16x128xf32>
      tpu.vector_store %arg20[%c0_71, %c0_72], %174 {strides = array<i32>} : memref<16x128xf32, #tpu.memory_space<vmem>>, vector<16x128xf32>,
    } else {
    }
    %c0 = arith.constant 0 : index
    %c0_1 = arith.constant 0 : index
    %3 = vector.load %arg20[%c0, %c0_1] : memref<16x128xf32, #tpu.memory_space<vmem>>, vector<16x128xf32>
    %c0_2 = arith.constant 0 : index
    %c0_3 = arith.constant 0 : index
    %c0_4 = arith.constant 0 : index
    %4 = vector.load %arg4[%c0_2, %c0_3, %c0_4] : memref<1x1x128xf32, #tpu.memory_space<vmem>>, vector<1x1x128xf32>
    %5 = vector.shape_cast %4 : vector<1x1x128xf32> to vector<1x128xf32>
    %c0_5 = arith.constant 0 : index
    %c0_6 = arith.constant 0 : index
    %c0_7 = arith.constant 0 : index
    %6 = vector.load %arg5[%c0_5, %c0_6, %c0_7] : memref<1x1x128xf32, #tpu.memory_space<vmem>>, vector<1x1x128xf32>
    %7 = vector.shape_cast %6 : vector<1x1x128xf32> to vector<1x128xf32>
    %cst = arith.constant dense<0.000000e+00> : vector<16xf32>
    %8 = vector.multi_reduction <add>, %3, %cst [1] : vector<16x128xf32> to vector<16xf32>
    %9 = vector.shape_cast %8 : vector<16xf32> to vector<16x1xf32>
    %cst_8 = arith.constant 1.280000e+02 : f32
    %10 = vector.broadcast %cst_8 : f32 to vector<16x1xf32>
    %11 = arith.divf %9, %10 : vector<16x1xf32>
    %12 = vector.broadcast %11 : vector<16x1xf32> to vector<16x128xf32>
    %13 = arith.subf %3, %12 : vector<16x128xf32>
    %14 = arith.mulf %13, %13 : vector<16x128xf32>
    %cst_9 = arith.constant dense<0.000000e+00> : vector<16xf32>
    %15 = vector.multi_reduction <add>, %14, %cst_9 [1] : vector<16x128xf32> to vector<16xf32>
    %16 = vector.shape_cast %15 : vector<16xf32> to vector<16x1xf32>
    %cst_10 = arith.constant 1.280000e+02 : f32
    %17 = vector.broadcast %cst_10 : f32 to vector<16x1xf32>
    %18 = arith.divf %16, %17 : vector<16x1xf32>
    %19 = vector.broadcast %11 : vector<16x1xf32> to vector<16x128xf32>
    %20 = arith.subf %3, %19 : vector<16x128xf32>
    %cst_11 = arith.constant 9.99999974E-6 : f32
    %21 = vector.broadcast %cst_11 : f32 to vector<16x1xf32>
    %22 = arith.addf %18, %21 : vector<16x1xf32>
    %23 = math.rsqrt %22 : vector<16x1xf32>
    %24 = vector.broadcast %23 : vector<16x1xf32> to vector<16x128xf32>
    %25 = arith.mulf %20, %24 : vector<16x128xf32>
    %26 = vector.broadcast %5 : vector<1x128xf32> to vector<16x128xf32>
    %27 = arith.mulf %25, %26 : vector<16x128xf32>
    %28 = vector.broadcast %7 : vector<1x128xf32> to vector<16x128xf32>
    %29 = arith.addf %27, %28 : vector<16x128xf32>
    %30 = arith.truncf %29 : vector<16x128xf32> to vector<16x128xbf16>
    %c0_12 = arith.constant 0 : index
    %c0_13 = arith.constant 0 : index
    %c0_14 = arith.constant 0 : index
    %31 = vector.load %arg6[%c0_12, %c0_13, %c0_14] : memref<1x128x384xbf16, #tpu.memory_space<vmem>>, vector<1x128x384xbf16>
    %32 = vector.shape_cast %31 : vector<1x128x384xbf16> to vector<128x384xbf16>
    %cst_15 = arith.constant dense<0.000000e+00> : vector<16x384xf32>
    %33 = tpu.matmul %30, %32, %cst_15 {dimension_numbers = #tpu.dot_dimension_numbers<[1], [0], [0], [1], [0, 0, 1, 1], [], []>} : vector<16x128xbf16>, vector<128x384xbf16>, vector<16x384xf32> -> vector<16x384xf32>
    %c0_16 = arith.constant 0 : index
    %c0_17 = arith.constant 0 : index
    %c0_18 = arith.constant 0 : index
    %34 = vector.load %arg7[%c0_16, %c0_17, %c0_18] : memref<1x1x384xf32, #tpu.memory_space<vmem>>, vector<1x1x384xf32>
    %35 = vector.shape_cast %34 : vector<1x1x384xf32> to vector<1x384xf32>
    %36 = vector.broadcast %35 : vector<1x384xf32> to vector<16x384xf32>
    %37 = arith.addf %33, %36 : vector<16x384xf32>
    %38 = vector.extract_strided_slice %37 {offsets = [0, 0], sizes = [16, 32], strides = [1, 1]} : vector<16x384xf32> to vector<16x32xf32>
    %39 = vector.extract_strided_slice %37 {offsets = [0, 32], sizes = [16, 32], strides = [1, 1]} : vector<16x384xf32> to vector<16x32xf32>
    %40 = vector.extract_strided_slice %37 {offsets = [0, 64], sizes = [16, 32], strides = [1, 1]} : vector<16x384xf32> to vector<16x32xf32>
    %41 = vector.extract_strided_slice %37 {offsets = [0, 96], sizes = [16, 32], strides = [1, 1]} : vector<16x384xf32> to vector<16x32xf32>
    %42 = vector.shape_cast %38 : vector<16x32xf32> to vector<1x16x32xf32>
    %43 = vector.shape_cast %39 : vector<16x32xf32> to vector<1x16x32xf32>
    %44 = vector.shape_cast %40 : vector<16x32xf32> to vector<1x16x32xf32>
    %45 = vector.shape_cast %41 : vector<16x32xf32> to vector<1x16x32xf32>
    %46 = tpu.concatenate %42, %43, %44, %45 in 0 : vector<1x16x32xf32>, vector<1x16x32xf32>, vector<1x16x32xf32>, vector<1x16x32xf32> -> vector<4x16x32xf32>
    %cst_19 = arith.constant 0.176776692 : f32
    %47 = vector.broadcast %cst_19 : f32 to vector<4x16x32xf32>
    %48 = arith.mulf %46, %47 : vector<4x16x32xf32>
    %49 = vector.extract_strided_slice %37 {offsets = [0, 128], sizes = [16, 32], strides = [1, 1]} : vector<16x384xf32> to vector<16x32xf32>
    %50 = vector.extract_strided_slice %37 {offsets = [0, 160], sizes = [16, 32], strides = [1, 1]} : vector<16x384xf32> to vector<16x32xf32>
    %51 = vector.extract_strided_slice %37 {offsets = [0, 192], sizes = [16, 32], strides = [1, 1]} : vector<16x384xf32> to vector<16x32xf32>
    %52 = vector.extract_strided_slice %37 {offsets = [0, 224], sizes = [16, 32], strides = [1, 1]} : vector<16x384xf32> to vector<16x32xf32>
    %53 = vector.shape_cast %49 : vector<16x32xf32> to vector<1x16x32xf32>
    %54 = vector.shape_cast %50 : vector<16x32xf32> to vector<1x16x32xf32>
    %55 = vector.shape_cast %51 : vector<16x32xf32> to vector<1x16x32xf32>
    %56 = vector.shape_cast %52 : vector<16x32xf32> to vector<1x16x32xf32>
    %57 = tpu.concatenate %53, %54, %55, %56 in 0 : vector<1x16x32xf32>, vector<1x16x32xf32>, vector<1x16x32xf32>, vector<1x16x32xf32> -> vector<4x16x32xf32>
    %58 = vector.extract_strided_slice %37 {offsets = [0, 256], sizes = [16, 32], strides = [1, 1]} : vector<16x384xf32> to vector<16x32xf32>
    %59 = vector.extract_strided_slice %37 {offsets = [0, 288], sizes = [16, 32], strides = [1, 1]} : vector<16x384xf32> to vector<16x32xf32>
    %60 = vector.extract_strided_slice %37 {offsets = [0, 320], sizes = [16, 32], strides = [1, 1]} : vector<16x384xf32> to vector<16x32xf32>
    %61 = vector.extract_strided_slice %37 {offsets = [0, 352], sizes = [16, 32], strides = [1, 1]} : vector<16x384xf32> to vector<16x32xf32>
    %62 = vector.shape_cast %58 : vector<16x32xf32> to vector<1x16x32xf32>
    %63 = vector.shape_cast %59 : vector<16x32xf32> to vector<1x16x32xf32>
    %64 = vector.shape_cast %60 : vector<16x32xf32> to vector<1x16x32xf32>
    %65 = vector.shape_cast %61 : vector<16x32xf32> to vector<1x16x32xf32>
    %66 = tpu.concatenate %62, %63, %64, %65 in 0 : vector<1x16x32xf32>, vector<1x16x32xf32>, vector<1x16x32xf32>, vector<1x16x32xf32> -> vector<4x16x32xf32>
    %67 = tpu.iota {dimensions = array<i32: 1>} : vector<1x16x16xi32>
    %68 = tpu.iota {dimensions = array<i32: 2>} : vector<1x16x16xi32>
    %69 = arith.cmpi sle, %68, %67 : vector<1x16x16xi32>
    %c0_20 = arith.constant 0 : index
    %c0_21 = arith.constant 0 : index
    %c0_22 = arith.constant 0 : index
    %70 = vector.load %arg3[%c0_20, %c0_21, %c0_22] : memref<1x1x16xf32, #tpu.memory_space<vmem>>, vector<1x1x16xf32>
    %cst_23 = arith.constant 5.000000e-01 : f32
    %71 = vector.broadcast %cst_23 : f32 to vector<1x1x16xf32>
    %72 = arith.cmpf ogt, %70, %71 : vector<1x1x16xf32>
    %73 = vector.broadcast %72 : vector<1x1x16xi1> to vector<1x16x16xi1>
    %74 = arith.andi %69, %73 : vector<1x16x16xi1>
    %75 = arith.truncf %48 : vector<4x16x32xf32> to vector<4x16x32xbf16>
    %76 = arith.truncf %57 : vector<4x16x32xf32> to vector<4x16x32xbf16>
    "tpu.trace_start"() <{level = 10 : i32, message = "hqd,hkd->hqk"}> : () -> ()
    %cst_24 = arith.constant dense<0.000000e+00> : vector<4x16x16xf32>
    %77 = tpu.matmul %75, %76, %cst_24 {dimension_numbers = #tpu.dot_dimension_numbers<[2], [2], [1], [1], [0, 0, 0, 1, 1, 1], [0], [0]>} : vector<4x16x32xbf16>, vector<4x16x32xbf16>, vector<4x16x16xf32> -> vector<4x16x16xf32>
    %cst_25 = arith.constant -1.000000e+30 : f32
    "tpu.trace_stop"() : () -> ()
    %78 = vector.shape_cast %74 : vector<1x16x16xi1> to vector<1x16x16xi1>
    %79 = vector.broadcast %78 : vector<1x16x16xi1> to vector<4x16x16xi1>
    %80 = vector.broadcast %cst_25 : f32 to vector<4x16x16xf32>
    %81 = arith.select %79, %77, %80 : vector<4x16x16xi1>, vector<4x16x16xf32>
    %cst_26 = arith.constant dense<0xFF800000> : vector<4x16xf32>
    %82 = vector.multi_reduction <maximumf>, %81, %cst_26 [2] : vector<4x16x16xf32> to vector<4x16xf32>
    %83 = vector.shape_cast %82 : vector<4x16xf32> to vector<4x16x1xf32>
    %84 = vector.broadcast %83 : vector<4x16x1xf32> to vector<4x16x16xf32>
    %85 = arith.subf %81, %84 : vector<4x16x16xf32>
    %86 = math.exp %85 : vector<4x16x16xf32>
    %cst_27 = arith.constant dense<0.000000e+00> : vector<4x16xf32>
    %87 = vector.multi_reduction <add>, %86, %cst_27 [2] : vector<4x16x16xf32> to vector<4x16xf32>
    %88 = vector.shape_cast %87 : vector<4x16xf32> to vector<4x16x1xf32>
    %89 = tpu.reciprocal %88 {approx = true} : vector<4x16x1xf32> -> vector<4x16x1xf32>
    %90 = vector.broadcast %89 : vector<4x16x1xf32> to vector<4x16x16xf32>
    %91 = arith.mulf %86, %90 : vector<4x16x16xf32>
    %92 = arith.truncf %91 : vector<4x16x16xf32> to vector<4x16x16xbf16>
    %93 = arith.truncf %66 : vector<4x16x32xf32> to vector<4x16x32xbf16>
    "tpu.trace_start"() <{level = 10 : i32, message = "hqk,hkd->hqd"}> : () -> ()
    %cst_28 = arith.constant dense<0.000000e+00> : vector<4x16x32xf32>
    %94 = tpu.matmul %92, %93, %cst_28 {dimension_numbers = #tpu.dot_dimension_numbers<[2], [1], [1], [2], [0, 0, 0, 1, 1, 2], [0], [0]>} : vector<4x16x16xbf16>, vector<4x16x32xbf16>, vector<4x16x32xf32> -> vector<4x16x32xf32>
    "tpu.trace_stop"() : () -> ()
    %95 = vector.extract_strided_slice %94 {offsets = [0, 0, 0], sizes = [1, 16, 32], strides = [1, 1, 1]} : vector<4x16x32xf32> to vector<1x16x32xf32>
    %96 = vector.shape_cast %95 : vector<1x16x32xf32> to vector<16x32xf32>
    %97 = vector.extract_strided_slice %94 {offsets = [1, 0, 0], sizes = [1, 16, 32], strides = [1, 1, 1]} : vector<4x16x32xf32> to vector<1x16x32xf32>
    %98 = vector.shape_cast %97 : vector<1x16x32xf32> to vector<16x32xf32>
    %99 = vector.extract_strided_slice %94 {offsets = [2, 0, 0], sizes = [1, 16, 32], strides = [1, 1, 1]} : vector<4x16x32xf32> to vector<1x16x32xf32>
    %100 = vector.shape_cast %99 : vector<1x16x32xf32> to vector<16x32xf32>
    %101 = vector.extract_strided_slice %94 {offsets = [3, 0, 0], sizes = [1, 16, 32], strides = [1, 1, 1]} : vector<4x16x32xf32> to vector<1x16x32xf32>
    %102 = vector.shape_cast %101 : vector<1x16x32xf32> to vector<16x32xf32>
    %103 = tpu.concatenate %96, %98, %100, %102 in 1 : vector<16x32xf32>, vector<16x32xf32>, vector<16x32xf32>, vector<16x32xf32> -> vector<16x128xf32>
    %104 = arith.truncf %103 : vector<16x128xf32> to vector<16x128xbf16>
    %c0_29 = arith.constant 0 : index
    %c0_30 = arith.constant 0 : index
    %c0_31 = arith.constant 0 : index
    %105 = vector.load %arg8[%c0_29, %c0_30, %c0_31] : memref<1x128x128xbf16, #tpu.memory_space<vmem>>, vector<1x128x128xbf16>
    %106 = vector.shape_cast %105 : vector<1x128x128xbf16> to vector<128x128xbf16>
    %cst_32 = arith.constant dense<0.000000e+00> : vector<16x128xf32>
    %107 = tpu.matmul %104, %106, %cst_32 {dimension_numbers = #tpu.dot_dimension_numbers<[1], [0], [0], [1], [0, 0, 1, 1], [], []>} : vector<16x128xbf16>, vector<128x128xbf16>, vector<16x128xf32> -> vector<16x128xf32>
    %c0_33 = arith.constant 0 : index
    %c0_34 = arith.constant 0 : index
    %c0_35 = arith.constant 0 : index
    %108 = vector.load %arg9[%c0_33, %c0_34, %c0_35] : memref<1x1x128xf32, #tpu.memory_space<vmem>>, vector<1x1x128xf32>
    %109 = vector.shape_cast %108 : vector<1x1x128xf32> to vector<1x128xf32>
    %110 = vector.broadcast %109 : vector<1x128xf32> to vector<16x128xf32>
    %111 = arith.addf %107, %110 : vector<16x128xf32>
    %112 = arith.addf %3, %111 : vector<16x128xf32>
    %c0_36 = arith.constant 0 : index
    %c0_37 = arith.constant 0 : index
    %c0_38 = arith.constant 0 : index
    %113 = vector.load %arg10[%c0_36, %c0_37, %c0_38] : memref<1x1x128xf32, #tpu.memory_space<vmem>>, vector<1x1x128xf32>
    %114 = vector.shape_cast %113 : vector<1x1x128xf32> to vector<1x128xf32>
    %c0_39 = arith.constant 0 : index
    %c0_40 = arith.constant 0 : index
    %c0_41 = arith.constant 0 : index
    %115 = vector.load %arg11[%c0_39, %c0_40, %c0_41] : memref<1x1x128xf32, #tpu.memory_space<vmem>>, vector<1x1x128xf32>
    %116 = vector.shape_cast %115 : vector<1x1x128xf32> to vector<1x128xf32>
    %cst_42 = arith.constant dense<0.000000e+00> : vector<16xf32>
    %117 = vector.multi_reduction <add>, %112, %cst_42 [1] : vector<16x128xf32> to vector<16xf32>
    %118 = vector.shape_cast %117 : vector<16xf32> to vector<16x1xf32>
    %cst_43 = arith.constant 1.280000e+02 : f32
    %119 = vector.broadcast %cst_43 : f32 to vector<16x1xf32>
    %120 = arith.divf %118, %119 : vector<16x1xf32>
    %121 = vector.broadcast %120 : vector<16x1xf32> to vector<16x128xf32>
    %122 = arith.subf %112, %121 : vector<16x128xf32>
    %123 = arith.mulf %122, %122 : vector<16x128xf32>
    %cst_44 = arith.constant dense<0.000000e+00> : vector<16xf32>
    %124 = vector.multi_reduction <add>, %123, %cst_44 [1] : vector<16x128xf32> to vector<16xf32>
    %125 = vector.shape_cast %124 : vector<16xf32> to vector<16x1xf32>
    %cst_45 = arith.constant 1.280000e+02 : f32
    %126 = vector.broadcast %cst_45 : f32 to vector<16x1xf32>
    %127 = arith.divf %125, %126 : vector<16x1xf32>
    %128 = vector.broadcast %120 : vector<16x1xf32> to vector<16x128xf32>
    %129 = arith.subf %112, %128 : vector<16x128xf32>
    %cst_46 = arith.constant 9.99999974E-6 : f32
    %130 = vector.broadcast %cst_46 : f32 to vector<16x1xf32>
    %131 = arith.addf %127, %130 : vector<16x1xf32>
    %132 = math.rsqrt %131 : vector<16x1xf32>
    %133 = vector.broadcast %132 : vector<16x1xf32> to vector<16x128xf32>
    %134 = arith.mulf %129, %133 : vector<16x128xf32>
    %135 = vector.broadcast %114 : vector<1x128xf32> to vector<16x128xf32>
    %136 = arith.mulf %134, %135 : vector<16x128xf32>
    %137 = vector.broadcast %116 : vector<1x128xf32> to vector<16x128xf32>
    %138 = arith.addf %136, %137 : vector<16x128xf32>
    %139 = arith.truncf %138 : vector<16x128xf32> to vector<16x128xbf16>
    %c0_47 = arith.constant 0 : index
    %c0_48 = arith.constant 0 : index
    %c0_49 = arith.constant 0 : index
    %140 = vector.load %arg12[%c0_47, %c0_48, %c0_49] : memref<1x128x512xbf16, #tpu.memory_space<vmem>>, vector<1x128x512xbf16>
    %141 = vector.shape_cast %140 : vector<1x128x512xbf16> to vector<128x512xbf16>
    %cst_50 = arith.constant dense<0.000000e+00> : vector<16x512xf32>
    %142 = tpu.matmul %139, %141, %cst_50 {dimension_numbers = #tpu.dot_dimension_numbers<[1], [0], [0], [1], [0, 0, 1, 1], [], []>} : vector<16x128xbf16>, vector<128x512xbf16>, vector<16x512xf32> -> vector<16x512xf32>
    %c0_51 = arith.constant 0 : index
    %c0_52 = arith.constant 0 : index
    %c0_53 = arith.constant 0 : index
    %143 = vector.load %arg13[%c0_51, %c0_52, %c0_53] : memref<1x1x512xf32, #tpu.memory_space<vmem>>, vector<1x1x512xf32>
    %144 = vector.shape_cast %143 : vector<1x1x512xf32> to vector<1x512xf32>
    %145 = vector.broadcast %144 : vector<1x512xf32> to vector<16x512xf32>
    %146 = arith.addf %142, %145 : vector<16x512xf32>
    %cst_54 = arith.constant 5.000000e-01 : f32
    %147 = vector.broadcast %cst_54 : f32 to vector<16x512xf32>
    %148 = arith.mulf %147, %146 : vector<16x512xf32>
    %cst_55 = arith.constant 4.471500e-02 : f32
    %149 = vector.broadcast %cst_55 : f32 to vector<16x512xf32>
    %150 = arith.mulf %149, %146 : vector<16x512xf32>
    %151 = arith.mulf %150, %146 : vector<16x512xf32>
    %152 = arith.mulf %151, %146 : vector<16x512xf32>
    %153 = arith.addf %146, %152 : vector<16x512xf32>
    %cst_56 = arith.constant 0.797884583 : f32
    %154 = vector.broadcast %cst_56 : f32 to vector<16x512xf32>
    %155 = arith.mulf %154, %153 : vector<16x512xf32>
    %156 = math.tanh %155 : vector<16x512xf32>
    %cst_57 = arith.constant 1.000000e+00 : f32
    %157 = vector.broadcast %cst_57 : f32 to vector<16x512xf32>
    %158 = arith.addf %157, %156 : vector<16x512xf32>
    %159 = arith.mulf %148, %158 : vector<16x512xf32>
    %160 = arith.truncf %159 : vector<16x512xf32> to vector<16x512xbf16>
    %c0_58 = arith.constant 0 : index
    %c0_59 = arith.constant 0 : index
    %c0_60 = arith.constant 0 : index
    %161 = vector.load %arg14[%c0_58, %c0_59, %c0_60] : memref<1x512x128xbf16, #tpu.memory_space<vmem>>, vector<1x512x128xbf16>
    %162 = vector.shape_cast %161 : vector<1x512x128xbf16> to vector<512x128xbf16>
    %cst_61 = arith.constant dense<0.000000e+00> : vector<16x128xf32>
    %163 = tpu.matmul %160, %162, %cst_61 {dimension_numbers = #tpu.dot_dimension_numbers<[1], [0], [0], [1], [0, 0, 1, 1], [], []>} : vector<16x512xbf16>, vector<512x128xbf16>, vector<16x128xf32> -> vector<16x128xf32>
    %c0_62 = arith.constant 0 : index
    %c0_63 = arith.constant 0 : index
    %c0_64 = arith.constant 0 : index
    %164 = vector.load %arg15[%c0_62, %c0_63, %c0_64] : memref<1x1x128xf32, #tpu.memory_space<vmem>>, vector<1x1x128xf32>
    %165 = vector.shape_cast %164 : vector<1x1x128xf32> to vector<1x128xf32>
    %166 = vector.broadcast %165 : vector<1x128xf32> to vector<16x128xf32>
    %167 = arith.addf %163, %166 : vector<16x128xf32>
    %168 = arith.addf %112, %167 : vector<16x128xf32>
    %c0_65 = arith.constant 0 : index
    %c0_66 = arith.constant 0 : index
    %169 = vector.load %arg20[%c0_65, %c0_66] : memref<16x128xf32, #tpu.memory_space<vmem>>, vector<16x128xf32>
    tpu.vector_store %arg20[%c0_65, %c0_66], %168 {strides = array<i32>} : memref<16x128xf32, #tpu.memory_space<vmem>>, vector<16x128xf32>,
    %c1_i32 = arith.constant 1 : i32
    %170 = arith.cmpi eq, %arg1, %c1_i32 : i32
    %171 = arith.extui %170 : i1 to i32
    %c0_i32_67 = arith.constant 0 : i32
    %172 = arith.cmpi ne, %171, %c0_i32_67 : i32
    scf.if %172 {
      %c0_68 = arith.constant 0 : index
      %c0_69 = arith.constant 0 : index
      %173 = vector.load %arg16[%c0_68, %c0_69] : memref<1x128xf32, #tpu.memory_space<vmem>>, vector<1x128xf32>
      %c0_70 = arith.constant 0 : index
      %c0_71 = arith.constant 0 : index
      %174 = vector.load %arg17[%c0_70, %c0_71] : memref<1x128xf32, #tpu.memory_space<vmem>>, vector<1x128xf32>
      %cst_72 = arith.constant dense<0.000000e+00> : vector<16xf32>
      %175 = vector.multi_reduction <add>, %168, %cst_72 [1] : vector<16x128xf32> to vector<16xf32>
      %176 = vector.shape_cast %175 : vector<16xf32> to vector<16x1xf32>
      %cst_73 = arith.constant 1.280000e+02 : f32
      %177 = vector.broadcast %cst_73 : f32 to vector<16x1xf32>
      %178 = arith.divf %176, %177 : vector<16x1xf32>
      %179 = vector.broadcast %178 : vector<16x1xf32> to vector<16x128xf32>
      %180 = arith.subf %168, %179 : vector<16x128xf32>
      %181 = arith.mulf %180, %180 : vector<16x128xf32>
      %cst_74 = arith.constant dense<0.000000e+00> : vector<16xf32>
      %182 = vector.multi_reduction <add>, %181, %cst_74 [1] : vector<16x128xf32> to vector<16xf32>
      %183 = vector.shape_cast %182 : vector<16xf32> to vector<16x1xf32>
      %cst_75 = arith.constant 1.280000e+02 : f32
      %184 = vector.broadcast %cst_75 : f32 to vector<16x1xf32>
      %185 = arith.divf %183, %184 : vector<16x1xf32>
      %186 = vector.broadcast %178 : vector<16x1xf32> to vector<16x128xf32>
      %187 = arith.subf %168, %186 : vector<16x128xf32>
      %cst_76 = arith.constant 9.99999974E-6 : f32
      %188 = vector.broadcast %cst_76 : f32 to vector<16x1xf32>
      %189 = arith.addf %185, %188 : vector<16x1xf32>
      %190 = math.rsqrt %189 : vector<16x1xf32>
      %191 = vector.broadcast %190 : vector<16x1xf32> to vector<16x128xf32>
      %192 = arith.mulf %187, %191 : vector<16x128xf32>
      %193 = vector.broadcast %173 : vector<1x128xf32> to vector<16x128xf32>
      %194 = arith.mulf %192, %193 : vector<16x128xf32>
      %195 = vector.broadcast %174 : vector<1x128xf32> to vector<16x128xf32>
      %196 = arith.addf %194, %195 : vector<16x128xf32>
      %197 = arith.truncf %196 : vector<16x128xf32> to vector<16x128xbf16>
      %c0_77 = arith.constant 0 : index
      %c0_78 = arith.constant 0 : index
      %198 = vector.load %arg18[%c0_77, %c0_78] : memref<128x256xbf16, #tpu.memory_space<vmem>>, vector<128x256xbf16>
      %cst_79 = arith.constant dense<0.000000e+00> : vector<16x256xf32>
      %199 = tpu.matmul %197, %198, %cst_79 {dimension_numbers = #tpu.dot_dimension_numbers<[1], [0], [0], [1], [0, 0, 1, 1], [], []>} : vector<16x128xbf16>, vector<128x256xbf16>, vector<16x256xf32> -> vector<16x256xf32>
      %c0_80 = arith.constant 0 : index
      %c0_81 = arith.constant 0 : index
      %c0_82 = arith.constant 0 : index
      %200 = vector.load %arg19[%c0_80, %c0_81, %c0_82] : memref<1x16x256xf32, #tpu.memory_space<vmem>>, vector<1x16x256xf32>
      %201 = vector.shape_cast %200 : vector<1x16x256xf32> to vector<16x256xf32>
      %202 = vector.shape_cast %199 : vector<16x256xf32> to vector<1x16x256xf32>
      tpu.vector_store %arg19[%c0_80, %c0_81, %c0_82], %202 {strides = array<i32>} : memref<1x16x256xf32, #tpu.memory_space<vmem>>, vector<1x16x256xf32>,
    } else {
    }
    return
  }
  func.func @transform_0(%arg0: i32, %arg1: i32) -> (i32, i32, i32) {
    %c0_i32 = arith.constant 0 : i32
    %c0_i32_0 = arith.constant 0 : i32
    %c0_i32_1 = arith.constant 0 : i32
    return %arg0, %c0_i32, %c0_i32_0 : i32, i32, i32
  }
  func.func @transform_1(%arg0: i32, %arg1: i32) -> (i32, i32, i32) {
    %c0_i32 = arith.constant 0 : i32
    %c0_i32_0 = arith.constant 0 : i32
    %c0_i32_1 = arith.constant 0 : i32
    return %arg0, %c0_i32, %c0_i32_0 : i32, i32, i32
  }
  func.func @transform_2(%arg0: i32, %arg1: i32) -> (i32, i32, i32) {
    %c0_i32 = arith.constant 0 : i32
    %c0_i32_0 = arith.constant 0 : i32
    %c0_i32_1 = arith.constant 0 : i32
    return %arg1, %c0_i32, %c0_i32_0 : i32, i32, i32
  }
  func.func @transform_3(%arg0: i32, %arg1: i32) -> (i32, i32, i32) {
    %c0_i32 = arith.constant 0 : i32
    %c0_i32_0 = arith.constant 0 : i32
    %c0_i32_1 = arith.constant 0 : i32
    return %arg1, %c0_i32, %c0_i32_0 : i32, i32, i32
  }
  func.func @transform_4(%arg0: i32, %arg1: i32) -> (i32, i32, i32) {
    %c0_i32 = arith.constant 0 : i32
    %c0_i32_0 = arith.constant 0 : i32
    %c0_i32_1 = arith.constant 0 : i32
    return %arg1, %c0_i32, %c0_i32_0 : i32, i32, i32
  }
  func.func @transform_5(%arg0: i32, %arg1: i32) -> (i32, i32, i32) {
    %c0_i32 = arith.constant 0 : i32
    %c0_i32_0 = arith.constant 0 : i32
    %c0_i32_1 = arith.constant 0 : i32
    return %arg1, %c0_i32, %c0_i32_0 : i32, i32, i32
  }
  func.func @transform_6(%arg0: i32, %arg1: i32) -> (i32, i32, i32) {
    %c0_i32 = arith.constant 0 : i32
    %c0_i32_0 = arith.constant 0 : i32
    %c0_i32_1 = arith.constant 0 : i32
    return %arg1, %c0_i32, %c0_i32_0 : i32, i32, i32
  }
  func.func @transform_7(%arg0: i32, %arg1: i32) -> (i32, i32, i32) {
    %c0_i32 = arith.constant 0 : i32
    %c0_i32_0 = arith.constant 0 : i32
    %c0_i32_1 = arith.constant 0 : i32
    return %arg1, %c0_i32, %c0_i32_0 : i32, i32, i32
  }
  func.func @transform_8(%arg0: i32, %arg1: i32) -> (i32, i32, i32) {
    %c0_i32 = arith.constant 0 : i32
    %c0_i32_0 = arith.constant 0 : i32
    %c0_i32_1 = arith.constant 0 : i32
    return %arg1, %c0_i32, %c0_i32_0 : i32, i32, i32
  }
  func.func @transform_9(%arg0: i32, %arg1: i32) -> (i32, i32, i32) {
    %c0_i32 = arith.constant 0 : i32
    %c0_i32_0 = arith.constant 0 : i32
    %c0_i32_1 = arith.constant 0 : i32
    return %arg1, %c0_i32, %c0_i32_0 : i32, i32, i32
  }
  func.func @transform_10(%arg0: i32, %arg1: i32) -> (i32, i32, i32) {
    %c0_i32 = arith.constant 0 : i32
    %c0_i32_0 = arith.constant 0 : i32
    %c0_i32_1 = arith.constant 0 : i32
    return %arg1, %c0_i32, %c0_i32_0 : i32, i32, i32
  }
  func.func @transform_11(%arg0: i32, %arg1: i32) -> (i32, i32, i32) {
    %c0_i32 = arith.constant 0 : i32
    %c0_i32_0 = arith.constant 0 : i32
    %c0_i32_1 = arith.constant 0 : i32
    return %arg1, %c0_i32, %c0_i32_0 : i32, i32, i32
  }
  func.func @transform_12(%arg0: i32, %arg1: i32) -> (i32, i32, i32) {
    %c0_i32 = arith.constant 0 : i32
    %c0_i32_0 = arith.constant 0 : i32
    %c0_i32_1 = arith.constant 0 : i32
    return %arg1, %c0_i32, %c0_i32_0 : i32, i32, i32
  }
  func.func @transform_13(%arg0: i32, %arg1: i32) -> (i32, i32, i32) {
    %c0_i32 = arith.constant 0 : i32
    %c0_i32_0 = arith.constant 0 : i32
    %c0_i32_1 = arith.constant 0 : i32
    return %arg1, %c0_i32, %c0_i32_0 : i32, i32, i32
  }
  func.func @transform_14(%arg0: i32, %arg1: i32) -> (i32, i32) {
    %c0_i32 = arith.constant 0 : i32
    %c0_i32_0 = arith.constant 0 : i32
    %c0_i32_1 = arith.constant 0 : i32
    return %c0_i32, %c0_i32_0 : i32, i32
  }
  func.func @transform_15(%arg0: i32, %arg1: i32) -> (i32, i32) {
    %c0_i32 = arith.constant 0 : i32
    %c0_i32_0 = arith.constant 0 : i32
    %c0_i32_1 = arith.constant 0 : i32
    return %c0_i32, %c0_i32_0 : i32, i32
  }
  func.func @transform_16(%arg0: i32, %arg1: i32) -> (i32, i32) {
    %c0_i32 = arith.constant 0 : i32
    %c0_i32_0 = arith.constant 0 : i32
    %c0_i32_1 = arith.constant 0 : i32
    return %c0_i32, %c0_i32_0 : i32, i32
  }
  func.func @transform_17(%arg0: i32, %arg1: i32) -> (i32, i32, i32) {
    %c0_i32 = arith.constant 0 : i32
    %c0_i32_0 = arith.constant 0 : i32
    %c0_i32_1 = arith.constant 0 : i32
    return %arg0, %c0_i32, %c0_i32_0 : i32, i32, i32
  }
}

</mosaic_0001>

<llo_original>
// kernel: sonnet_gpt_forward.1
$region0: #{sonnet_gpt_forward.1}
  #allocation0 [shape = 'u32[]', space=smem, size = 0x4, offset = 0x4, fixed_abs, tag = 'smem constant byte address 0x4 - core index']
  #allocation1 [shape = 'u32[72,128]{1,0:T(1,128)}', space=vmem, size = 0x9000, scoped, tag = 'internal scratch']
  #allocation2 [shape = 'f32[16,128]{1,0:T(8,128)}', space=vmem, size = 0x2000, scoped, tag = 'scratch operand']
  %s0 = inlined_call_operand.vmem [shape: f32[2,16,128], index: 0, kind: input, shape index: {}]
  %s1 = inlined_call_operand.vmem [shape: f32[2,1,16], index: 1, kind: input, shape index: {}]
  %s2 = inlined_call_operand.vmem [shape: f32[2,1,128], index: 2, kind: input, shape index: {}]
  %s3 = inlined_call_operand.vmem [shape: f32[2,1,128], index: 3, kind: input, shape index: {}]
  %s4 = inlined_call_operand.hbm [shape: bf16[2,128,384], index: 4, kind: input, shape index: {}]
  %s5 = inlined_call_operand.vmem [shape: f32[2,1,384], index: 5, kind: input, shape index: {}]
  %s6 = inlined_call_operand.hbm [shape: bf16[2,128,128], index: 6, kind: input, shape index: {}]
  %s7 = inlined_call_operand.vmem [shape: f32[2,1,128], index: 7, kind: input, shape index: {}]
  %s8 = inlined_call_operand.vmem [shape: f32[2,1,128], index: 8, kind: input, shape index: {}]
  %s9 = inlined_call_operand.vmem [shape: f32[2,1,128], index: 9, kind: input, shape index: {}]
  %s10 = inlined_call_operand.vmem [shape: bf16[2,128,512], index: 10, kind: input, shape index: {}]
  %s11 = inlined_call_operand.vmem [shape: f32[2,1,512], index: 11, kind: input, shape index: {}]
  %s12 = inlined_call_operand.hbm [shape: bf16[2,512,128], index: 12, kind: input, shape index: {}]
  %s13 = inlined_call_operand.vmem [shape: f32[2,1,128], index: 13, kind: input, shape index: {}]
  %s14 = inlined_call_operand.vmem [shape: f32[1,128], index: 14, kind: input, shape index: {}]
  %s15 = inlined_call_operand.vmem [shape: f32[1,128], index: 15, kind: input, shape index: {}]
  %s16 = inlined_call_operand.hbm [shape: bf16[128,256], index: 16, kind: input, shape index: {}]
  %s17 = inlined_call_operand.hbm [shape: f32[2,16,256], index: 17, kind: output, shape index: {}]
  %s18 = sld [smem:[#allocation0]]
  $region125: #{sonnet_gpt_forward.1} parent=0
    _
  %s20 = ssub.s32 1, %s18
  %s21 = scalar_select 0, %s20, %s18
  $region1: #{sonnet_gpt_forward.1} parent=0
    #allocation3 [shape = 'u8[196608]{0}', space=vmem, size = 0x30000, scoped, tag = 'input window, operand 4']
    #allocation4 [shape = 's32[2]{0}', space=sflag, size = 0x8, scoped, tag = 'scoped memory for sonnet_gpt_forward.1']
    #allocation5 [shape = 's32[2]{0}', space=sflag, size = 0x8, scoped, tag = 'scoped memory for sonnet_gpt_forward.1']
    #allocation6 [shape = 'u8[65536]{0}', space=vmem, size = 0x10000, scoped, tag = 'input window, operand 6']
    #allocation7 [shape = 's32[2]{0}', space=sflag, size = 0x8, scoped, tag = 'scoped memory for sonnet_gpt_forward.1']
    #allocation8 [shape = 'u8[262144]{0}', space=vmem, size = 0x40000, scoped, tag = 'input window, operand 12']
    #allocation9 [shape = 'u8[65536]{0}', space=vmem, size = 0x10000, scoped, tag = 'input window, operand 16, single buffered']
    #allocation10 [shape = 's32[1]{0}', space=sflag, size = 0x4, scoped, tag = 'scoped memory for sonnet_gpt_forward.1']
    #allocation11 [shape = 'u8[32768]{0}', space=vmem, size = 0x8000, scoped, tag = 'output window, operand 0']
    %22 = vsyncpa [#allocation4], 0
    %s23 = scalar_lea.sflag [#allocation4], 1
    %24 = vsyncpa %s23, 0
    %25 = vsyncpa [#allocation7], 0
    %s26 = scalar_lea.sflag [#allocation7], 1
    %27 = vsyncpa %s26, 0
    %28 = vsyncpa [#allocation10], 0
    %29 = vsyncpa [#allocation5], 0
    %s30 = scalar_lea.sflag [#allocation5], 1
    %31 = vsyncpa %s30, 0
    loop: start=0, step=1, limit=6
    $region2: #{sonnet_gpt_forward.1} parent=1 // loop_pre_header
      _
    $region3: #{sonnet_gpt_forward.1} parent=1 // loop_header
      %s33 = sphi 0, %s37
      %p34 = scmp.ge.s32.totalorder %s33, 6
      %s40 = sphi 0, %s52
      %s41 = sphi 0, %s48
      %s42 = sphi 0, %s40
      %s43 = sphi 0, %s41
      %s44 = sphi 0, %s42
      %s45 = sphi 0, %s43
      %s55 = sphi 0, %s57
      %s58 = sphi 0, %s55
      %s59 = sphi 0, %s58
      %s75 = sphi 0, %s59
      %s81 = sphi 0, %s83
      %s84 = sphi 0, %s81
      %s85 = sphi 0, %s84
      %s101 = sphi 0, %s85
      %s107 = sphi 0, %s109
      %s110 = sphi 0, %s107
      %s111 = sphi 0, %s110
      %s127 = sphi 0, %s111
      %s133 = sphi 0, %s135
      %s136 = sphi 0, %s133
      %s137 = sphi 0, %s136
      %s153 = sphi 0, %s137
      %s159 = sphi 0, %s161
      %s162 = sphi 0, %s159
      %s163 = sphi 0, %s162
      %s179 = sphi 0, %s163
      %s185 = sphi 0, %s187
      %s188 = sphi 0, %s185
      %s189 = sphi 0, %s188
      %s205 = sphi 0, %s189
      %s211 = sphi 0, %s213
      %s214 = sphi 0, %s211
      %s215 = sphi 0, %s214
      %s231 = sphi 0, %s215
      %s237 = sphi 0, %s239
      %s240 = sphi 0, %s237
      %s241 = sphi 0, %s240
      %s257 = sphi 0, %s241
      %s263 = sphi 0, %s265
      %s266 = sphi 0, %s263
      %s267 = sphi 0, %s266
      %s283 = sphi 0, %s267
      %s289 = sphi 0, %s291
      %s292 = sphi 0, %s289
      %s293 = sphi 0, %s292
      %s309 = sphi 0, %s293
      %s315 = sphi 0, %s317
      %s318 = sphi 0, %s315
      %s319 = sphi 0, %s318
      %s335 = sphi 0, %s319
      %s341 = sphi 0, %s343
      %s344 = sphi 0, %s341
      %s345 = sphi 0, %s344
      %s361 = sphi 0, %s345
      %s367 = sphi 0, %s369
      %s370 = sphi 0, %s367
      %s371 = sphi 0, %s370
      %s387 = sphi 0, %s371
      %s393 = sphi 0, %s395
      %s396 = sphi 0, %s393
      %s397 = sphi 0, %s396
      %s413 = sphi 0, %s397
      %s417 = sphi 0, %s417
      %s419 = sphi 0, %s417
      %s420 = sphi 0, %s419
      %s434 = sphi 0, %s420
      %s438 = sphi 0, %s438
      %s440 = sphi 0, %s438
      %s441 = sphi 0, %s440
      %s455 = sphi 0, %s441
      %s459 = sphi 0, %s459
      %s461 = sphi 0, %s459
      %s462 = sphi 0, %s461
      %s476 = sphi 0, %s462
      %s482 = sphi 0, %s484
      %s485 = sphi 0, %s482
      %s486 = sphi 0, %s485
      %s502 = sphi 0, %s486
    $region4: #{sonnet_gpt_forward.1} parent=1 // loop_header_branch
      %36 = sbr.rel (%p34) target = $region8
    $region5: #{sonnet_gpt_forward.1} parent=1 // loop_body
      %s38 = ssub.s32 %s33, 1
      %s39 = ssub.s32 %s33, 2
      %s46 = sadd.s32 1, %s41
      %p47 = scmp.ge.s32.totalorder %s46, 2
      %s48 = scalar_select %p47, 0, %s46
      %s49 = sadd.s32 1, %s40
      %s50 = scalar_select %p47, %s49, %s40
      %p51 = scmp.ge.s32.totalorder %s50, 2
      %s52 = scalar_select %p51, 0, %s50
      %s53 = ssub.s32 %s40, %s52
      %p54 = scmp.eq.s32.totalorder %s53, 0
      %s56 = sadd.s32 %s55, 1
      %s57 = scalar_select %p54, %s55, %s56
      %p60 = pneg %p54
      %p61 = scmp.eq.s32.totalorder %s33, 3
      %p62 = por %p60, %p61
      %p63 = scmp.ne.s32.totalorder %s55, %s58
      %p64 = scmp.eq.s32.totalorder %s33, 0
      %p65 = por %p63, %p64
      %p66 = scmp.ne.s32.totalorder %s55, %s58
      %p67 = scmp.eq.s32.totalorder %s38, 3
      %p68 = por %p66, %p67
      %p69 = scmp.ne.s32.totalorder %s58, %s59
      %p70 = scmp.eq.s32.totalorder %s38, 0
      %p71 = por %p69, %p70
      %p72 = scmp.ne.s32.totalorder %s58, %s59
      %p73 = scmp.eq.s32.totalorder %s39, 3
      %p74 = por %p72, %p73
      %p76 = scmp.ne.s32.totalorder %s59, %s75
      %p77 = scmp.eq.s32.totalorder %s39, 0
      %p78 = por %p76, %p77
      %s79 = ssub.s32 %s40, %s52
      %p80 = scmp.eq.s32.totalorder %s79, 0
      %s82 = sadd.s32 %s81, 1
      %s83 = scalar_select %p80, %s81, %s82
      %p86 = pneg %p80
      %p87 = scmp.eq.s32.totalorder %s33, 3
      %p88 = por %p86, %p87
      %p89 = scmp.ne.s32.totalorder %s81, %s84
      %p90 = scmp.eq.s32.totalorder %s33, 0
      %p91 = por %p89, %p90
      %p92 = scmp.ne.s32.totalorder %s81, %s84
      %p93 = scmp.eq.s32.totalorder %s38, 3
      %p94 = por %p92, %p93
      %p95 = scmp.ne.s32.totalorder %s84, %s85
      %p96 = scmp.eq.s32.totalorder %s38, 0
      %p97 = por %p95, %p96
      %p98 = scmp.ne.s32.totalorder %s84, %s85
      %p99 = scmp.eq.s32.totalorder %s39, 3
      %p100 = por %p98, %p99
      %p102 = scmp.ne.s32.totalorder %s85, %s101
      %p103 = scmp.eq.s32.totalorder %s39, 0
      %p104 = por %p102, %p103
      %s105 = ssub.s32 %s41, %s48
      %p106 = scmp.eq.s32.totalorder %s105, 0
      %s108 = sadd.s32 %s107, 1
      %s109 = scalar_select %p106, %s107, %s108
      %p112 = pneg %p106
      %p113 = scmp.eq.s32.totalorder %s33, 3
      %p114 = por %p112, %p113
      %p115 = scmp.ne.s32.totalorder %s107, %s110
      %p116 = scmp.eq.s32.totalorder %s33, 0
      %p117 = por %p115, %p116
      %p118 = scmp.ne.s32.totalorder %s107, %s110
      %p119 = scmp.eq.s32.totalorder %s38, 3
      %p120 = por %p118, %p119
      %p121 = scmp.ne.s32.totalorder %s110, %s111
      %p122 = scmp.eq.s32.totalorder %s38, 0
      %p123 = por %p121, %p122
      %p124 = scmp.ne.s32.totalorder %s110, %s111
      %p125 = scmp.eq.s32.totalorder %s39, 3
      %p126 = por %p124, %p125
      %p128 = scmp.ne.s32.totalorder %s111, %s127
      %p129 = scmp.eq.s32.totalorder %s39, 0
      %p130 = por %p128, %p129
      %s131 = ssub.s32 %s41, %s48
      %p132 = scmp.eq.s32.totalorder %s131, 0
      %s134 = sadd.s32 %s133, 1
      %s135 = scalar_select %p132, %s133, %s134
      %p138 = pneg %p132
      %p139 = scmp.eq.s32.totalorder %s33, 3
      %p140 = por %p138, %p139
      %p141 = scmp.ne.s32.totalorder %s133, %s136
      %p142 = scmp.eq.s32.totalorder %s33, 0
      %p143 = por %p141, %p142
      %p144 = scmp.ne.s32.totalorder %s133, %s136
      %p145 = scmp.eq.s32.totalorder %s38, 3
      %p146 = por %p144, %p145
      %p147 = scmp.ne.s32.totalorder %s136, %s137
      %p148 = scmp.eq.s32.totalorder %s38, 0
      %p149 = por %p147, %p148
      %p150 = scmp.ne.s32.totalorder %s136, %s137
      %p151 = scmp.eq.s32.totalorder %s39, 3
      %p152 = por %p150, %p151
      %p154 = scmp.ne.s32.totalorder %s137, %s153
      %p155 = scmp.eq.s32.totalorder %s39, 0
      %p156 = por %p154, %p155
      %s157 = ssub.s32 %s41, %s48
      %p158 = scmp.eq.s32.totalorder %s157, 0
      %s160 = sadd.s32 %s159, 1
      %s161 = scalar_select %p158, %s159, %s160
      %p164 = pneg %p158
      %p165 = scmp.eq.s32.totalorder %s33, 3
      %p166 = por %p164, %p165
      %p167 = scmp.ne.s32.totalorder %s159, %s162
      %p168 = scmp.eq.s32.totalorder %s33, 0
      %p169 = por %p167, %p168
      %p170 = scmp.ne.s32.totalorder %s159, %s162
      %p171 = scmp.eq.s32.totalorder %s38, 3
      %p172 = por %p170, %p171
      %p173 = scmp.ne.s32.totalorder %s162, %s163
      %p174 = scmp.eq.s32.totalorder %s38, 0
      %p175 = por %p173, %p174
      %p176 = scmp.ne.s32.totalorder %s162, %s163
      %p177 = scmp.eq.s32.totalorder %s39, 3
      %p178 = por %p176, %p177
      %p180 = scmp.ne.s32.totalorder %s163, %s179
      %p181 = scmp.eq.s32.totalorder %s39, 0
      %p182 = por %p180, %p181
      %s183 = ssub.s32 %s41, %s48
      %p184 = scmp.eq.s32.totalorder %s183, 0
      %s186 = sadd.s32 %s185, 1
      %s187 = scalar_select %p184, %s185, %s186
      %p190 = pneg %p184
      %p191 = scmp.eq.s32.totalorder %s33, 3
      %p192 = por %p190, %p191
      %p193 = scmp.ne.s32.totalorder %s185, %s188
      %p194 = scmp.eq.s32.totalorder %s33, 0
      %p195 = por %p193, %p194
      %p196 = scmp.ne.s32.totalorder %s185, %s188
      %p197 = scmp.eq.s32.totalorder %s38, 3
      %p198 = por %p196, %p197
      %p199 = scmp.ne.s32.totalorder %s188, %s189
      %p200 = scmp.eq.s32.totalorder %s38, 0
      %p201 = por %p199, %p200
      %p202 = scmp.ne.s32.totalorder %s188, %s189
      %p203 = scmp.eq.s32.totalorder %s39, 3
      %p204 = por %p202, %p203
      %p206 = scmp.ne.s32.totalorder %s189, %s205
      %p207 = scmp.eq.s32.totalorder %s39, 0
      %p208 = por %p206, %p207
      %s209 = ssub.s32 %s41, %s48
      %p210 = scmp.eq.s32.totalorder %s209, 0
      %s212 = sadd.s32 %s211, 1
      %s213 = scalar_select %p210, %s211, %s212
      %p216 = pneg %p210
      %p217 = scmp.eq.s32.totalorder %s33, 3
      %p218 = por %p216, %p217
      %p219 = scmp.ne.s32.totalorder %s211, %s214
      %p220 = scmp.eq.s32.totalorder %s33, 0
      %p221 = por %p219, %p220
      %p222 = scmp.ne.s32.totalorder %s211, %s214
      %p223 = scmp.eq.s32.totalorder %s38, 3
      %p224 = por %p222, %p223
      %p225 = scmp.ne.s32.totalorder %s214, %s215
      %p226 = scmp.eq.s32.totalorder %s38, 0
      %p227 = por %p225, %p226
      %p228 = scmp.ne.s32.totalorder %s214, %s215
      %p229 = scmp.eq.s32.totalorder %s39, 3
      %p230 = por %p228, %p229
      %p232 = scmp.ne.s32.totalorder %s215, %s231
      %p233 = scmp.eq.s32.totalorder %s39, 0
      %p234 = por %p232, %p233
      %s235 = ssub.s32 %s41, %s48
      %p236 = scmp.eq.s32.totalorder %s235, 0
      %s238 = sadd.s32 %s237, 1
      %s239 = scalar_select %p236, %s237, %s238
      %p242 = pneg %p236
      %p243 = scmp.eq.s32.totalorder %s33, 3
      %p244 = por %p242, %p243
      %p245 = scmp.ne.s32.totalorder %s237, %s240
      %p246 = scmp.eq.s32.totalorder %s33, 0
      %p247 = por %p245, %p246
      %p248 = scmp.ne.s32.totalorder %s237, %s240
      %p249 = scmp.eq.s32.totalorder %s38, 3
      %p250 = por %p248, %p249
      %p251 = scmp.ne.s32.totalorder %s240, %s241
      %p252 = scmp.eq.s32.totalorder %s38, 0
      %p253 = por %p251, %p252
      %p254 = scmp.ne.s32.totalorder %s240, %s241
      %p255 = scmp.eq.s32.totalorder %s39, 3
      %p256 = por %p254, %p255
      %p258 = scmp.ne.s32.totalorder %s241, %s257
      %p259 = scmp.eq.s32.totalorder %s39, 0
      %p260 = por %p258, %p259
      %s261 = ssub.s32 %s41, %s48
      %p262 = scmp.eq.s32.totalorder %s261, 0
      %s264 = sadd.s32 %s263, 1
      %s265 = scalar_select %p262, %s263, %s264
      %p268 = pneg %p262
      %p269 = scmp.eq.s32.totalorder %s33, 3
      %p270 = por %p268, %p269
      %p271 = scmp.ne.s32.totalorder %s263, %s266
      %p272 = scmp.eq.s32.totalorder %s33, 0
      %p273 = por %p271, %p272
      %p274 = scmp.ne.s32.totalorder %s263, %s266
      %p275 = scmp.eq.s32.totalorder %s38, 3
      %p276 = por %p274, %p275
      %p277 = scmp.ne.s32.totalorder %s266, %s267
      %p278 = scmp.eq.s32.totalorder %s38, 0
      %p279 = por %p277, %p278
      %p280 = scmp.ne.s32.totalorder %s266, %s267
      %p281 = scmp.eq.s32.totalorder %s39, 3
      %p282 = por %p280, %p281
      %p284 = scmp.ne.s32.totalorder %s267, %s283
      %p285 = scmp.eq.s32.totalorder %s39, 0
      %p286 = por %p284, %p285
      %s287 = ssub.s32 %s41, %s48
      %p288 = scmp.eq.s32.totalorder %s287, 0
      %s290 = sadd.s32 %s289, 1
      %s291 = scalar_select %p288, %s289, %s290
      %p294 = pneg %p288
      %p295 = scmp.eq.s32.totalorder %s33, 3
      %p296 = por %p294, %p295
      %p297 = scmp.ne.s32.totalorder %s289, %s292
      %p298 = scmp.eq.s32.totalorder %s33, 0
      %p299 = por %p297, %p298
      %p300 = scmp.ne.s32.totalorder %s289, %s292
      %p301 = scmp.eq.s32.totalorder %s38, 3
      %p302 = por %p300, %p301
      %p303 = scmp.ne.s32.totalorder %s292, %s293
      %p304 = scmp.eq.s32.totalorder %s38, 0
      %p305 = por %p303, %p304
      %p306 = scmp.ne.s32.totalorder %s292, %s293
      %p307 = scmp.eq.s32.totalorder %s39, 3
      %p308 = por %p306, %p307
      %p310 = scmp.ne.s32.totalorder %s293, %s309
      %p311 = scmp.eq.s32.totalorder %s39, 0
      %p312 = por %p310, %p311
      %s313 = ssub.s32 %s41, %s48
      %p314 = scmp.eq.s32.totalorder %s313, 0
      %s316 = sadd.s32 %s315, 1
      %s317 = scalar_select %p314, %s315, %s316
      %p320 = pneg %p314
      %p321 = scmp.eq.s32.totalorder %s33, 3
      %p322 = por %p320, %p321
      %p323 = scmp.ne.s32.totalorder %s315, %s318
      %p324 = scmp.eq.s32.totalorder %s33, 0
      %p325 = por %p323, %p324
      %p326 = scmp.ne.s32.totalorder %s315, %s318
      %p327 = scmp.eq.s32.totalorder %s38, 3
      %p328 = por %p326, %p327
      %p329 = scmp.ne.s32.totalorder %s318, %s319
      %p330 = scmp.eq.s32.totalorder %s38, 0
      %p331 = por %p329, %p330
      %p332 = scmp.ne.s32.totalorder %s318, %s319
      %p333 = scmp.eq.s32.totalorder %s39, 3
      %p334 = por %p332, %p333
      %p336 = scmp.ne.s32.totalorder %s319, %s335
      %p337 = scmp.eq.s32.totalorder %s39, 0
      %p338 = por %p336, %p337
      %s339 = ssub.s32 %s41, %s48
      %p340 = scmp.eq.s32.totalorder %s339, 0
      %s342 = sadd.s32 %s341, 1
      %s343 = scalar_select %p340, %s341, %s342
      %p346 = pneg %p340
      %p347 = scmp.eq.s32.totalorder %s33, 3
      %p348 = por %p346, %p347
      %p349 = scmp.ne.s32.totalorder %s341, %s344
      %p350 = scmp.eq.s32.totalorder %s33, 0
      %p351 = por %p349, %p350
      %p352 = scmp.ne.s32.totalorder %s341, %s344
      %p353 = scmp.eq.s32.totalorder %s38, 3
      %p354 = por %p352, %p353
      %p355 = scmp.ne.s32.totalorder %s344, %s345
      %p356 = scmp.eq.s32.totalorder %s38, 0
      %p357 = por %p355, %p356
      %p358 = scmp.ne.s32.totalorder %s344, %s345
      %p359 = scmp.eq.s32.totalorder %s39, 3
      %p360 = por %p358, %p359
      %p362 = scmp.ne.s32.totalorder %s345, %s361
      %p363 = scmp.eq.s32.totalorder %s39, 0
      %p364 = por %p362, %p363
      %s365 = ssub.s32 %s41, %s48
      %p366 = scmp.eq.s32.totalorder %s365, 0
      %s368 = sadd.s32 %s367, 1
      %s369 = scalar_select %p366, %s367, %s368
      %p372 = pneg %p366
      %p373 = scmp.eq.s32.totalorder %s33, 3
      %p374 = por %p372, %p373
      %p375 = scmp.ne.s32.totalorder %s367, %s370
      %p376 = scmp.eq.s32.totalorder %s33, 0
      %p377 = por %p375, %p376
      %p378 = scmp.ne.s32.totalorder %s367, %s370
      %p379 = scmp.eq.s32.totalorder %s38, 3
      %p380 = por %p378, %p379
      %p381 = scmp.ne.s32.totalorder %s370, %s371
      %p382 = scmp.eq.s32.totalorder %s38, 0
      %p383 = por %p381, %p382
      %p384 = scmp.ne.s32.totalorder %s370, %s371
      %p385 = scmp.eq.s32.totalorder %s39, 3
      %p386 = por %p384, %p385
      %p388 = scmp.ne.s32.totalorder %s371, %s387
      %p389 = scmp.eq.s32.totalorder %s39, 0
      %p390 = por %p388, %p389
      %s391 = ssub.s32 %s41, %s48
      %p392 = scmp.eq.s32.totalorder %s391, 0
      %s394 = sadd.s32 %s393, 1
      %s395 = scalar_select %p392, %s393, %s394
      %p398 = pneg %p392
      %p399 = scmp.eq.s32.totalorder %s33, 3
      %p400 = por %p398, %p399
      %p401 = scmp.ne.s32.totalorder %s393, %s396
      %p402 = scmp.eq.s32.totalorder %s33, 0
      %p403 = por %p401, %p402
      %p404 = scmp.ne.s32.totalorder %s393, %s396
      %p405 = scmp.eq.s32.totalorder %s38, 3
      %p406 = por %p404, %p405
      %p407 = scmp.ne.s32.totalorder %s396, %s397
      %p408 = scmp.eq.s32.totalorder %s38, 0
      %p409 = por %p407, %p408
      %p410 = scmp.ne.s32.totalorder %s396, %s397
      %p411 = scmp.eq.s32.totalorder %s39, 3
      %p412 = por %p410, %p411
      %p414 = scmp.ne.s32.totalorder %s397, %s413
      %p415 = scmp.eq.s32.totalorder %s39, 0
      %p416 = por %p414, %p415
      %s418 = sadd.s32 %s417, 1
      %p421 = scmp.eq.s32.totalorder %s33, 3
      %p422 = scmp.ne.s32.totalorder %s417, %s419
      %p423 = scmp.eq.s32.totalorder %s33, 0
      %p424 = por %p422, %p423
      %p425 = scmp.ne.s32.totalorder %s417, %s419
      %p426 = scmp.eq.s32.totalorder %s38, 3
      %p427 = por %p425, %p426
      %p428 = scmp.ne.s32.totalorder %s419, %s420
      %p429 = scmp.eq.s32.totalorder %s38, 0
      %p430 = por %p428, %p429
      %p431 = scmp.ne.s32.totalorder %s419, %s420
      %p432 = scmp.eq.s32.totalorder %s39, 3
      %p433 = por %p431, %p432
      %p435 = scmp.ne.s32.totalorder %s420, %s434
      %p436 = scmp.eq.s32.totalorder %s39, 0
      %p437 = por %p435, %p436
      %s439 = sadd.s32 %s438, 1
      %p442 = scmp.eq.s32.totalorder %s33, 3
      %p443 = scmp.ne.s32.totalorder %s438, %s440
      %p444 = scmp.eq.s32.totalorder %s33, 0
      %p445 = por %p443, %p444
      %p446 = scmp.ne.s32.totalorder %s438, %s440
      %p447 = scmp.eq.s32.totalorder %s38, 3
      %p448 = por %p446, %p447
      %p449 = scmp.ne.s32.totalorder %s440, %s441
      %p450 = scmp.eq.s32.totalorder %s38, 0
      %p451 = por %p449, %p450
      %p452 = scmp.ne.s32.totalorder %s440, %s441
      %p453 = scmp.eq.s32.totalorder %s39, 3
      %p454 = por %p452, %p453
      %p456 = scmp.ne.s32.totalorder %s441, %s455
      %p457 = scmp.eq.s32.totalorder %s39, 0
      %p458 = por %p456, %p457
      %s460 = sadd.s32 %s459, 1
      %p463 = scmp.eq.s32.totalorder %s33, 3
      %p464 = scmp.ne.s32.totalorder %s459, %s461
      %p465 = scmp.eq.s32.totalorder %s33, 0
      %p466 = por %p464, %p465
      %p467 = scmp.ne.s32.totalorder %s459, %s461
      %p468 = scmp.eq.s32.totalorder %s38, 3
      %p469 = por %p467, %p468
      %p470 = scmp.ne.s32.totalorder %s461, %s462
      %p471 = scmp.eq.s32.totalorder %s38, 0
      %p472 = por %p470, %p471
      %p473 = scmp.ne.s32.totalorder %s461, %s462
      %p474 = scmp.eq.s32.totalorder %s39, 3
      %p475 = por %p473, %p474
      %p477 = scmp.ne.s32.totalorder %s462, %s476
      %p478 = scmp.eq.s32.totalorder %s39, 0
      %p479 = por %p477, %p478
      %s480 = ssub.s32 %s40, %s52
      %p481 = scmp.eq.s32.totalorder %s480, 0
      %s483 = sadd.s32 %s482, 1
      %s484 = scalar_select %p481, %s482, %s483
      %p487 = pneg %p481
      %p488 = scmp.eq.s32.totalorder %s33, 3
      %p489 = por %p487, %p488
      %p490 = scmp.ne.s32.totalorder %s482, %s485
      %p491 = scmp.eq.s32.totalorder %s33, 0
      %p492 = por %p490, %p491
      %p493 = scmp.ne.s32.totalorder %s482, %s485
      %p494 = scmp.eq.s32.totalorder %s38, 3
      %p495 = por %p493, %p494
      %p496 = scmp.ne.s32.totalorder %s485, %s486
      %p497 = scmp.eq.s32.totalorder %s38, 0
      %p498 = por %p496, %p497
      %p499 = scmp.ne.s32.totalorder %s485, %s486
      %p500 = scmp.eq.s32.totalorder %s39, 3
      %p501 = por %p499, %p500
      %p503 = scmp.ne.s32.totalorder %s486, %s502
      %p504 = scmp.eq.s32.totalorder %s39, 0
      %p505 = por %p503, %p504
      %p506 = scmp.le.s32.totalorder 1, %s33
      %p507 = scmp.lt.s32.totalorder %s33, 5
      %p508 = pnand %p506, %p507
      %p509 = pneg %p508
      // Predicated region
      $region9: #{sonnet_gpt_forward.1} parent=5 // pred_check
        _
      $region10: #{sonnet_gpt_forward.1} parent=5 // pred_check_branch
        %511 = sbr.rel (%p508) target = $region12
      $region11: #{sonnet_gpt_forward.1} parent=5 // pred_region
        %s512 = ssub.s32 %s33, 1
        // Predicated region
        $region13: #{sonnet_gpt_forward.1} parent=11 // pred_check
          %p513 = pneg %p430
        $region14: #{sonnet_gpt_forward.1} parent=11 // pred_check_branch
          %515 = sbr.rel (%p513) target = $region16
        $region15: #{sonnet_gpt_forward.1} parent=11 // pred_region
          _
        $region16: #{sonnet_gpt_forward.1} parent=11 // pred_fallthru
          _
        // Predicated region
        $region17: #{sonnet_gpt_forward.1} parent=11 // pred_check
          %p516 = pneg %p451
        $region18: #{sonnet_gpt_forward.1} parent=11 // pred_check_branch
          %518 = sbr.rel (%p516) target = $region20
        $region19: #{sonnet_gpt_forward.1} parent=11 // pred_region
          _
        $region20: #{sonnet_gpt_forward.1} parent=11 // pred_fallthru
          _
        // Predicated region
        $region21: #{sonnet_gpt_forward.1} parent=11 // pred_check
          %p519 = pneg %p472
        $region22: #{sonnet_gpt_forward.1} parent=11 // pred_check_branch
          %521 = sbr.rel (%p519) target = $region24
        $region23: #{sonnet_gpt_forward.1} parent=11 // pred_region
          %523 = vsyncadd [#allocation10], 0
          %s524 = sshll.u32 %s16, 4
          %s525 = int_to_ptr.hbm [resolvable:$true] %s524
          %s526 = sshll.u32 [#allocation9], 4
          %s527 = int_to_ptr.vmem [resolvable:$true] %s526
          %532 = dma.hbm_to_vmem [thread:$0]  %s525, 2048, %s527, [#allocation10], 128, 128, 8
        $region24: #{sonnet_gpt_forward.1} parent=11 // pred_fallthru
          _
      $region12: #{sonnet_gpt_forward.1} parent=5 // pred_fallthru
        _
      %p533 = scmp.lt.s32.totalorder %s33, 4
      // Predicated region
      $region25: #{sonnet_gpt_forward.1} parent=5 // pred_check
        %p534 = pneg %p533
      $region26: #{sonnet_gpt_forward.1} parent=5 // pred_check_branch
        %536 = sbr.rel (%p534) target = $region28
      $region27: #{sonnet_gpt_forward.1} parent=5 // pred_region
        // Predicated region
        $region29: #{sonnet_gpt_forward.1} parent=27 // pred_check
          %p537 = pneg %p65
        $region30: #{sonnet_gpt_forward.1} parent=27 // pred_check_branch
          %539 = sbr.rel (%p537) target = $region32
        $region31: #{sonnet_gpt_forward.1} parent=27 // pred_region
          %p540 = scmp.lt.s32.totalorder %s40, 1
          %s541 = scalar_select %p540, %s40, 1
          %s542 = smul.addr %s541, 2
          %s543 = smul.addr %s542, 8
          %s544 = scalar_lea.vmem %s0, %s543
        $region32: #{sonnet_gpt_forward.1} parent=27 // pred_fallthru
          _
        // Predicated region
        $region33: #{sonnet_gpt_forward.1} parent=27 // pred_check
          %p545 = pneg %p91
        $region34: #{sonnet_gpt_forward.1} parent=27 // pred_check_branch
          %547 = sbr.rel (%p545) target = $region36
        $region35: #{sonnet_gpt_forward.1} parent=27 // pred_region
          %p548 = scmp.lt.s32.totalorder %s40, 1
          %s549 = scalar_select %p548, %s40, 1
          %s550 = scalar_lea.vmem %s1, %s549
        $region36: #{sonnet_gpt_forward.1} parent=27 // pred_fallthru
          _
        // Predicated region
        $region37: #{sonnet_gpt_forward.1} parent=27 // pred_check
          %p551 = pneg %p117
        $region38: #{sonnet_gpt_forward.1} parent=27 // pred_check_branch
          %553 = sbr.rel (%p551) target = $region40
        $region39: #{sonnet_gpt_forward.1} parent=27 // pred_region
          %p554 = scmp.lt.s32.totalorder %s41, 1
          %s555 = scalar_select %p554, %s41, 1
          %s556 = scalar_lea.vmem %s2, %s555
        $region40: #{sonnet_gpt_forward.1} parent=27 // pred_fallthru
          _
        // Predicated region
        $region41: #{sonnet_gpt_forward.1} parent=27 // pred_check
          %p557 = pneg %p143
        $region42: #{sonnet_gpt_forward.1} parent=27 // pred_check_branch
          %559 = sbr.rel (%p557) target = $region44
        $region43: #{sonnet_gpt_forward.1} parent=27 // pred_region
          %p560 = scmp.lt.s32.totalorder %s41, 1
          %s561 = scalar_select %p560, %s41, 1
          %s562 = scalar_lea.vmem %s3, %s561
        $region44: #{sonnet_gpt_forward.1} parent=27 // pred_fallthru
          _
        // Predicated region
        $region45: #{sonnet_gpt_forward.1} parent=27 // pred_check
          %p563 = pneg %p169
        $region46: #{sonnet_gpt_forward.1} parent=27 // pred_check_branch
          %565 = sbr.rel (%p563) target = $region48
        $region47: #{sonnet_gpt_forward.1} parent=27 // pred_region
          %s566 = sand.u32 %s159, 1
          %s567 = scalar_lea.sflag [#allocation4], %s566
          %s568 = sand.u32 %s159, 1
          %s569 = smul.addr %s568, 192
          %s570 = scalar_lea.vmem [#allocation3], %s569
          %572 = vsyncadd %s567, 0
          %s573 = smul.addr %s41, 48
          %s574 = smul.addr %s573, 4
          %s575 = scalar_lea.hbm %s4, %s574
          %s576 = sshll.u32 %s575, 4
          %s577 = int_to_ptr.hbm [resolvable:$true] %s576
          %s578 = sshll.u32 %s570, 4
          %s579 = int_to_ptr.vmem [resolvable:$true] %s578
          %584 = dma.hbm_to_vmem [thread:$0]  %s577, 3072, %s579, %s567, 192, 192, 12
        $region48: #{sonnet_gpt_forward.1} parent=27 // pred_fallthru
          _
        // Predicated region
        $region49: #{sonnet_gpt_forward.1} parent=27 // pred_check
          %p585 = pneg %p195
        $region50: #{sonnet_gpt_forward.1} parent=27 // pred_check_branch
          %587 = sbr.rel (%p585) target = $region52
        $region51: #{sonnet_gpt_forward.1} parent=27 // pred_region
          %p588 = scmp.lt.s32.totalorder %s41, 1
          %s589 = scalar_select %p588, %s41, 1
          %s590 = smul.addr %s589, 3
          %s591 = scalar_lea.vmem %s5, %s590
        $region52: #{sonnet_gpt_forward.1} parent=27 // pred_fallthru
          _
        // Predicated region
        $region53: #{sonnet_gpt_forward.1} parent=27 // pred_check
          %p592 = pneg %p221
        $region54: #{sonnet_gpt_forward.1} parent=27 // pred_check_branch
          %594 = sbr.rel (%p592) target = $region56
        $region55: #{sonnet_gpt_forward.1} parent=27 // pred_region
          %s595 = sand.u32 %s33, 1
          %s596 = scalar_lea.sflag [#allocation7], %s595
          %s597 = sand.u32 %s211, 1
          %s598 = smul.addr %s597, 64
          %s599 = scalar_lea.vmem [#allocation6], %s598
          %601 = vsyncadd %s596, 0
          %s602 = smul.addr %s41, 16
          %s603 = smul.addr %s602, 4
          %s604 = scalar_lea.hbm %s6, %s603
          %s605 = sshll.u32 %s604, 4
          %s606 = int_to_ptr.hbm [resolvable:$true] %s605
          %s607 = sshll.u32 %s599, 4
          %s608 = int_to_ptr.vmem [resolvable:$true] %s607
          %613 = dma.hbm_to_vmem [thread:$0]  %s606, 1024, %s608, %s596, 64, 64, 4
        $region56: #{sonnet_gpt_forward.1} parent=27 // pred_fallthru
          _
        // Predicated region
        $region57: #{sonnet_gpt_forward.1} parent=27 // pred_check
          %p614 = pneg %p247
        $region58: #{sonnet_gpt_forward.1} parent=27 // pred_check_branch
          %616 = sbr.rel (%p614) target = $region60
        $region59: #{sonnet_gpt_forward.1} parent=27 // pred_region
          %p617 = scmp.lt.s32.totalorder %s41, 1
          %s618 = scalar_select %p617, %s41, 1
          %s619 = scalar_lea.vmem %s7, %s618
        $region60: #{sonnet_gpt_forward.1} parent=27 // pred_fallthru
          _
        // Predicated region
        $region61: #{sonnet_gpt_forward.1} parent=27 // pred_check
          %p620 = pneg %p273
        $region62: #{sonnet_gpt_forward.1} parent=27 // pred_check_branch
          %622 = sbr.rel (%p620) target = $region64
        $region63: #{sonnet_gpt_forward.1} parent=27 // pred_region
          %p623 = scmp.lt.s32.totalorder %s41, 1
          %s624 = scalar_select %p623, %s41, 1
          %s625 = scalar_lea.vmem %s8, %s624
        $region64: #{sonnet_gpt_forward.1} parent=27 // pred_fallthru
          _
        // Predicated region
        $region65: #{sonnet_gpt_forward.1} parent=27 // pred_check
          %p626 = pneg %p299
        $region66: #{sonnet_gpt_forward.1} parent=27 // pred_check_branch
          %628 = sbr.rel (%p626) target = $region68
        $region67: #{sonnet_gpt_forward.1} parent=27 // pred_region
          %p629 = scmp.lt.s32.totalorder %s41, 1
          %s630 = scalar_select %p629, %s41, 1
          %s631 = scalar_lea.vmem %s9, %s630
        $region68: #{sonnet_gpt_forward.1} parent=27 // pred_fallthru
          _
        // Predicated region
        $region69: #{sonnet_gpt_forward.1} parent=27 // pred_check
          %p632 = pneg %p325
        $region70: #{sonnet_gpt_forward.1} parent=27 // pred_check_branch
          %634 = sbr.rel (%p632) target = $region72
        $region71: #{sonnet_gpt_forward.1} parent=27 // pred_region
          %p635 = scmp.lt.s32.totalorder %s41, 1
          %s636 = scalar_select %p635, %s41, 1
          %s637 = smul.addr %s636, 64
          %s638 = smul.addr %s637, 4
          %s639 = scalar_lea.vmem %s10, %s638
        $region72: #{sonnet_gpt_forward.1} parent=27 // pred_fallthru
          _
        // Predicated region
        $region73: #{sonnet_gpt_forward.1} parent=27 // pred_check
          %p640 = pneg %p351
        $region74: #{sonnet_gpt_forward.1} parent=27 // pred_check_branch
          %642 = sbr.rel (%p640) target = $region76
        $region75: #{sonnet_gpt_forward.1} parent=27 // pred_region
          %p643 = scmp.lt.s32.totalorder %s41, 1
          %s644 = scalar_select %p643, %s41, 1
          %s645 = smul.addr %s644, 4
          %s646 = scalar_lea.vmem %s11, %s645
        $region76: #{sonnet_gpt_forward.1} parent=27 // pred_fallthru
          _
        // Predicated region
        $region77: #{sonnet_gpt_forward.1} parent=27 // pred_check
          %p647 = pneg %p377
        $region78: #{sonnet_gpt_forward.1} parent=27 // pred_check_branch
          %649 = sbr.rel (%p647) target = $region80
        $region79: #{sonnet_gpt_forward.1} parent=27 // pred_region
          %s650 = sand.u32 %s33, 1
          %s651 = scalar_lea.sflag [#allocation7], %s650
          %s652 = sand.u32 %s367, 1
          %s653 = smul.addr %s652, 256
          %s654 = scalar_lea.vmem [#allocation8], %s653
          %656 = vsyncadd %s651, 0
          %s657 = smul.addr %s41, 64
          %s658 = smul.addr %s657, 4
          %s659 = scalar_lea.hbm %s12, %s658
          %s660 = sshll.u32 %s659, 4
          %s661 = int_to_ptr.hbm [resolvable:$true] %s660
          %s662 = sshll.u32 %s654, 4
          %s663 = int_to_ptr.vmem [resolvable:$true] %s662
          %668 = dma.hbm_to_vmem [thread:$0]  %s661, 4096, %s663, %s651, 64, 64, 4
        $region80: #{sonnet_gpt_forward.1} parent=27 // pred_fallthru
          _
        // Predicated region
        $region81: #{sonnet_gpt_forward.1} parent=27 // pred_check
          %p669 = pneg %p403
        $region82: #{sonnet_gpt_forward.1} parent=27 // pred_check_branch
          %671 = sbr.rel (%p669) target = $region84
        $region83: #{sonnet_gpt_forward.1} parent=27 // pred_region
          %p672 = scmp.lt.s32.totalorder %s41, 1
          %s673 = scalar_select %p672, %s41, 1
          %s674 = scalar_lea.vmem %s13, %s673
        $region84: #{sonnet_gpt_forward.1} parent=27 // pred_fallthru
          _
      $region28: #{sonnet_gpt_forward.1} parent=5 // pred_fallthru
        _
      %p675 = scmp.le.s32.totalorder 1, %s33
      %p676 = scmp.lt.s32.totalorder %s33, 5
      %p677 = pnand %p675, %p676
      %p678 = pneg %p677
      // Predicated region
      $region85: #{sonnet_gpt_forward.1} parent=5 // pred_check
        _
      $region86: #{sonnet_gpt_forward.1} parent=5 // pred_check_branch
        %680 = sbr.rel (%p677) target = $region88
      $region87: #{sonnet_gpt_forward.1} parent=5 // pred_region
        %s681 = ssub.s32 %s33, 1
        %s682 = sand.u32 %s162, 1
        %s683 = scalar_lea.sflag [#allocation4], %s682
        %s684 = sand.u32 %s162, 1
        %s685 = smul.addr %s684, 192
        %s686 = scalar_lea.vmem [#allocation3], %s685
        // Predicated region
        $region89: #{sonnet_gpt_forward.1} parent=87 // pred_check
          %p687 = pneg %p175
        $region90: #{sonnet_gpt_forward.1} parent=87 // pred_check_branch
          %689 = sbr.rel (%p687) target = $region92
        $region91: #{sonnet_gpt_forward.1} parent=87 // pred_region
          %691 = dma.done %s683, 3072
        $region92: #{sonnet_gpt_forward.1} parent=87 // pred_fallthru
          _
        %s692 = sand.u32 %s38, 1
        %s693 = scalar_lea.sflag [#allocation7], %s692
        %s694 = sand.u32 %s214, 1
        %s695 = smul.addr %s694, 64
        %s696 = scalar_lea.vmem [#allocation6], %s695
        // Predicated region
        $region93: #{sonnet_gpt_forward.1} parent=87 // pred_check
          %p697 = pneg %p227
        $region94: #{sonnet_gpt_forward.1} parent=87 // pred_check_branch
          %699 = sbr.rel (%p697) target = $region96
        $region95: #{sonnet_gpt_forward.1} parent=87 // pred_region
          %701 = dma.done %s693, 1024
        $region96: #{sonnet_gpt_forward.1} parent=87 // pred_fallthru
          _
        %s702 = sand.u32 %s38, 1
        %s703 = scalar_lea.sflag [#allocation7], %s702
        %s704 = sand.u32 %s370, 1
        %s705 = smul.addr %s704, 256
        %s706 = scalar_lea.vmem [#allocation8], %s705
        // Predicated region
        $region97: #{sonnet_gpt_forward.1} parent=87 // pred_check
          %p707 = pneg %p383
        $region98: #{sonnet_gpt_forward.1} parent=87 // pred_check_branch
          %709 = sbr.rel (%p707) target = $region100
        $region99: #{sonnet_gpt_forward.1} parent=87 // pred_region
          %711 = dma.done %s703, 4096
        $region100: #{sonnet_gpt_forward.1} parent=87 // pred_fallthru
          _
        // Predicated region
        $region101: #{sonnet_gpt_forward.1} parent=87 // pred_check
          %p712 = pneg %p472
        $region102: #{sonnet_gpt_forward.1} parent=87 // pred_check_branch
          %714 = sbr.rel (%p712) target = $region104
        $region103: #{sonnet_gpt_forward.1} parent=87 // pred_region
          %716 = dma.done [#allocation10], 2048
        $region104: #{sonnet_gpt_forward.1} parent=87 // pred_fallthru
          _
        %p717 = scmp.lt.s32.totalorder %s42, 1
        %s718 = scalar_select %p717, %s42, 1
        %s719 = smul.addr %s718, 2
        %s720 = smul.addr %s719, 8
        %s721 = scalar_lea.vmem %s0, %s720
        %p722 = pneg %p71
        %p723 = pneg %p68
        %p724 = scmp.lt.s32.totalorder %s42, 1
        %s725 = scalar_select %p724, %s42, 1
        %s726 = scalar_lea.vmem %s1, %s725
        %p727 = pneg %p97
        %p728 = pneg %p94
        %p729 = scmp.lt.s32.totalorder %s43, 1
        %s730 = scalar_select %p729, %s43, 1
        %s731 = scalar_lea.vmem %s2, %s730
        %p732 = pneg %p123
        %p733 = pneg %p120
        %p734 = scmp.lt.s32.totalorder %s43, 1
        %s735 = scalar_select %p734, %s43, 1
        %s736 = scalar_lea.vmem %s3, %s735
        %p737 = pneg %p149
        %p738 = pneg %p146
        %s739 = sand.u32 %s162, 1
        %s740 = scalar_lea.sflag [#allocation4], %s739
        %s741 = sand.u32 %s162, 1
        %s742 = smul.addr %s741, 192
        %s743 = scalar_lea.vmem [#allocation3], %s742
        %p744 = pneg %p175
        %p745 = pneg %p172
        %p746 = scmp.lt.s32.totalorder %s43, 1
        %s747 = scalar_select %p746, %s43, 1
        %s748 = smul.addr %s747, 3
        %s749 = scalar_lea.vmem %s5, %s748
        %p750 = pneg %p201
        %p751 = pneg %p198
        %s752 = sand.u32 %s38, 1
        %s753 = scalar_lea.sflag [#allocation7], %s752
        %s754 = sand.u32 %s214, 1
        %s755 = smul.addr %s754, 64
        %s756 = scalar_lea.vmem [#allocation6], %s755
        %p757 = pneg %p227
        %p758 = pneg %p224
        %p759 = scmp.lt.s32.totalorder %s43, 1
        %s760 = scalar_select %p759, %s43, 1
        %s761 = scalar_lea.vmem %s7, %s760
        %p762 = pneg %p253
        %p763 = pneg %p250
        %p764 = scmp.lt.s32.totalorder %s43, 1
        %s765 = scalar_select %p764, %s43, 1
        %s766 = scalar_lea.vmem %s8, %s765
        %p767 = pneg %p279
        %p768 = pneg %p276
        %p769 = scmp.lt.s32.totalorder %s43, 1
        %s770 = scalar_select %p769, %s43, 1
        %s771 = scalar_lea.vmem %s9, %s770
        %p772 = pneg %p305
        %p773 = pneg %p302
        %p774 = scmp.lt.s32.totalorder %s43, 1
        %s775 = scalar_select %p774, %s43, 1
        %s776 = smul.addr %s775, 64
        %s777 = smul.addr %s776, 4
        %s778 = scalar_lea.vmem %s10, %s777
        %p779 = pneg %p331
        %p780 = pneg %p328
        %p781 = scmp.lt.s32.totalorder %s43, 1
        %s782 = scalar_select %p781, %s43, 1
        %s783 = smul.addr %s782, 4
        %s784 = scalar_lea.vmem %s11, %s783
        %p785 = pneg %p357
        %p786 = pneg %p354
        %s787 = sand.u32 %s38, 1
        %s788 = scalar_lea.sflag [#allocation7], %s787
        %s789 = sand.u32 %s370, 1
        %s790 = smul.addr %s789, 256
        %s791 = scalar_lea.vmem [#allocation8], %s790
        %p792 = pneg %p383
        %p793 = pneg %p380
        %p794 = scmp.lt.s32.totalorder %s43, 1
        %s795 = scalar_select %p794, %s43, 1
        %s796 = scalar_lea.vmem %s13, %s795
        %p797 = pneg %p409
        %p798 = pneg %p406
        %p799 = pneg %p430
        %p800 = pneg %p427
        %p801 = pneg %p451
        %p802 = pneg %p448
        %p803 = pneg %p472
        %p804 = pneg %p469
        %p805 = pneg %p498
        %p806 = pneg %p495
        %s807 = sand.u32 %s485, 1
        %s808 = scalar_lea.sflag [#allocation5], %s807
        %s809 = sand.u32 %s485, 1
        %s810 = smul.addr %s809, 32
        %s811 = scalar_lea.vmem [#allocation11], %s810
        %p812 = scmp.lt.s32.totalorder %s42, 1
        %s813 = scalar_select %p812, %s42, 1
        %s814 = smul.addr %s813, 2
        %s815 = smul.addr %s814, 8
        %s816 = scalar_lea.vmem %s0, %s815
        %p817 = scmp.lt.s32.totalorder %s42, 1
        %s818 = scalar_select %p817, %s42, 1
        %s819 = scalar_lea.vmem %s1, %s818
        %p820 = scmp.lt.s32.totalorder %s43, 1
        %s821 = scalar_select %p820, %s43, 1
        %s822 = scalar_lea.vmem %s2, %s821
        %p823 = scmp.lt.s32.totalorder %s43, 1
        %s824 = scalar_select %p823, %s43, 1
        %s825 = scalar_lea.vmem %s3, %s824
        %p826 = scmp.lt.s32.totalorder %s43, 1
        %s827 = scalar_select %p826, %s43, 1
        %s828 = smul.addr %s827, 3
        %s829 = scalar_lea.vmem %s5, %s828
        %p830 = scmp.lt.s32.totalorder %s43, 1
        %s831 = scalar_select %p830, %s43, 1
        %s832 = scalar_lea.vmem %s7, %s831
        %p833 = scmp.lt.s32.totalorder %s43, 1
        %s834 = scalar_select %p833, %s43, 1
        %s835 = scalar_lea.vmem %s8, %s834
        %p836 = scmp.lt.s32.totalorder %s43, 1
        %s837 = scalar_select %p836, %s43, 1
        %s838 = scalar_lea.vmem %s9, %s837
        %p839 = scmp.lt.s32.totalorder %s43, 1
        %s840 = scalar_select %p839, %s43, 1
        %s841 = smul.addr %s840, 64
        %s842 = smul.addr %s841, 4
        %s843 = scalar_lea.vmem %s10, %s842
        %p844 = scmp.lt.s32.totalorder %s43, 1
        %s845 = scalar_select %p844, %s43, 1
        %s846 = smul.addr %s845, 4
        %s847 = scalar_lea.vmem %s11, %s846
        %p848 = scmp.lt.s32.totalorder %s43, 1
        %s849 = scalar_select %p848, %s43, 1
        %s850 = scalar_lea.vmem %s13, %s849
        %p852 = scmp.eq.s32.totalorder %s43, 0
        // Predicated region
        $region105: #{sonnet_gpt_forward.1} parent=87 // pred_check
          %p853 = pneg %p852
        $region106: #{sonnet_gpt_forward.1} parent=87 // pred_check_branch
          %855 = sbr.rel (%p853) target = $region108
        $region107: #{sonnet_gpt_forward.1} parent=87 // pred_region
          %v856 = vld [vmem:[%s816] sm:$0xff]
          %v857 = vld [vmem:[%s816 + $0x8] sm:$0xff]
          %858 = vst [vmem:[#allocation2] sm:$0xff] %v856
          %859 = vst [vmem:[#allocation2 + $0x8] sm:$0xff] %v857
        $region108: #{sonnet_gpt_forward.1} parent=87 // pred_fallthru
          _
        %v860 = vld [vmem:[#allocation2] sm:$0xff]
        %v861 = vld [vmem:[#allocation2 + $0x8] sm:$0xff]
        %v862 = vld [vmem:[%s822] sm:$0x1]
        %v863 = vld [vmem:[%s825] sm:$0x1]
        %864 = vadd.xlane.f32.xlu0 %v860
        %v865 = vpop.xlane.xlu0 %864
        %866 = vadd.xlane.f32.xlu0 %v861
        %v867 = vpop.xlane.xlu0 %866
        %v868 = vrcp.pop 128.0
        %v869 = vmul.f32 128.0, %v868
        %v870 = vsub.f32 1.0, %v869
        %v871 = vmul.f32 %v868, %v870
        %v872 = vadd.f32 %v868, %v871
        %vm873 = vweird.f32 %v868
        %v874 = vsel %vm873, %v868, %v872
        %v875 = vmul.f32 %v865, %v874
        %v876 = vmul.f32 %v867, %v874
        %v877 = vsub.f32 %v860, %v875
        %v878 = vsub.f32 %v861, %v876
        %v879 = vmul.f32 %v877, %v877
        %v880 = vmul.f32 %v878, %v878
        %881 = vadd.xlane.f32.xlu0 %v879
        %v882 = vpop.xlane.xlu0 %881
        %883 = vadd.xlane.f32.xlu0 %v880
        %v884 = vpop.xlane.xlu0 %883
        %v885 = vmul.f32 %v882, %v874
        %v886 = vmul.f32 %v884, %v874
        %v887 = vadd.f32 %v885, 1e-05
        %v888 = vadd.f32 %v886, 1e-05
        %v889 = vrsqrt.pop %v887
        %v890 = vmul.f32 %v889, %v887
        %v891 = vmul.f32 %v890, %v889
        %v892 = vmul.f32 0.5, %v891
        %v893 = vsub.f32 1.5, %v892
        %v894 = vmul.f32 %v889, %v893
        %vm895 = vweird.f32 %v887
        %vm896 = vweird.f32 %v889
        %vm897 = vmor %vm895, %vm896
        %v898 = vsel %vm897, %v889, %v894
        %v899 = vrsqrt.pop %v888
        %v900 = vmul.f32 %v899, %v888
        %v901 = vmul.f32 %v900, %v899
        %v902 = vmul.f32 0.5, %v901
        %v903 = vsub.f32 1.5, %v902
        %v904 = vmul.f32 %v899, %v903
        %vm905 = vweird.f32 %v888
        %vm906 = vweird.f32 %v899
        %vm907 = vmor %vm905, %vm906
        %v908 = vsel %vm907, %v899, %v904
        %v909 = vmul.f32 %v877, %v898
        %v910 = vmul.f32 %v878, %v908
        %v912 = vperm.slane %v862, 0
        %v914 = vmul.f32 %v909, %v912
        %v915 = vmul.f32 %v910, %v912
        %v917 = vperm.slane %v863, 0
        %v919 = vadd.f32 %v914, %v917
        %v920 = vadd.f32 %v915, %v917
        %v921 = vpack.c.bf16 %v920, %v919
        %v922 = vld [vmem:[%s686] sm:$0xff]
        %v923 = vld [vmem:[%s686 + $0x8] sm:$0xf]
        %v924 = vld [vmem:[%s686 + $0xc] sm:$0xff]
        %v925 = vld [vmem:[%s686 + $0x14] sm:$0xf]
        %v926 = vld [vmem:[%s686 + $0x18] sm:$0xff]
        %v927 = vld [vmem:[%s686 + $0x20] sm:$0xf]
        %v928 = vld [vmem:[%s686 + $0x24] sm:$0xff]
        %v929 = vld [vmem:[%s686 + $0x2c] sm:$0xf]
        %v930 = vld [vmem:[%s686 + $0x30] sm:$0xff]
        %v931 = vld [vmem:[%s686 + $0x38] sm:$0xf]
        %v932 = vld [vmem:[%s686 + $0x3c] sm:$0xff]
        %v933 = vld [vmem:[%s686 + $0x44] sm:$0xf]
        %v934 = vld [vmem:[%s686 + $0x48] sm:$0xff]
        %v935 = vld [vmem:[%s686 + $0x50] sm:$0xf]
        %v936 = vld [vmem:[%s686 + $0x54] sm:$0xff]
        %v937 = vld [vmem:[%s686 + $0x5c] sm:$0xf]
        %v938 = vld [vmem:[%s686 + $0x60] sm:$0xff]
        %v939 = vld [vmem:[%s686 + $0x68] sm:$0xf]
        %v940 = vld [vmem:[%s686 + $0x6c] sm:$0xff]
        %v941 = vld [vmem:[%s686 + $0x74] sm:$0xf]
        %v942 = vld [vmem:[%s686 + $0x78] sm:$0xff]
        %v943 = vld [vmem:[%s686 + $0x80] sm:$0xf]
        %v944 = vld [vmem:[%s686 + $0x84] sm:$0xff]
        %v945 = vld [vmem:[%s686 + $0x8c] sm:$0xf]
        %v946 = vld [vmem:[%s686 + $0x90] sm:$0xff]
        %v947 = vld [vmem:[%s686 + $0x98] sm:$0xf]
        %v948 = vld [vmem:[%s686 + $0x9c] sm:$0xff]
        %v949 = vld [vmem:[%s686 + $0xa4] sm:$0xf]
        %v950 = vld [vmem:[%s686 + $0xa8] sm:$0xff]
        %v951 = vld [vmem:[%s686 + $0xb0] sm:$0xf]
        %v952 = vld [vmem:[%s686 + $0xb4] sm:$0xff]
        %v953 = vld [vmem:[%s686 + $0xbc] sm:$0xf]
        %v954 = vld [vmem:[%s829] sm:$0x7]
        %v956 = vperm.slane %v954, 0
        %v957 = vperm.slane %v954, 1
        %v958 = vperm.slane %v954, 2
        %v994 = vunpack.c.l.b16 %v922
        %v995 = vunpack.c.h.b16 %v922
        %v996 = vunpack.c.l.b16 %v923
        %v997 = vunpack.c.l.b16 %v924
        %v998 = vunpack.c.h.b16 %v924
        %v999 = vunpack.c.l.b16 %v925
        %v1000 = vunpack.c.l.b16 %v926
        %v1001 = vunpack.c.h.b16 %v926
        %v1002 = vunpack.c.l.b16 %v927
        %v1003 = vunpack.c.l.b16 %v928
        %v1004 = vunpack.c.h.b16 %v928
        %v1005 = vunpack.c.l.b16 %v929
        %v1006 = vunpack.c.l.b16 %v930
        %v1007 = vunpack.c.h.b16 %v930
        %v1008 = vunpack.c.l.b16 %v931
        %v1009 = vunpack.c.l.b16 %v932
        %v1010 = vunpack.c.h.b16 %v932
        %v1011 = vunpack.c.l.b16 %v933
        %v1012 = vunpack.c.l.b16 %v934
        %v1013 = vunpack.c.h.b16 %v934
        %v1014 = vunpack.c.l.b16 %v935
        %v1015 = vunpack.c.l.b16 %v936
        %v1016 = vunpack.c.h.b16 %v936
        %v1017 = vunpack.c.l.b16 %v937
        %v1018 = vunpack.c.l.b16 %v938
        %v1019 = vunpack.c.h.b16 %v938
        %v1020 = vunpack.c.l.b16 %v939
        %v1021 = vunpack.c.l.b16 %v940
        %v1022 = vunpack.c.h.b16 %v940
        %v1023 = vunpack.c.l.b16 %v941
        %v1024 = vunpack.c.l.b16 %v942
        %v1025 = vunpack.c.h.b16 %v942
        %v1026 = vunpack.c.l.b16 %v943
        %v1027 = vunpack.c.l.b16 %v944
        %v1028 = vunpack.c.h.b16 %v944
        %v1029 = vunpack.c.l.b16 %v945
        %v1030 = vunpack.c.l.b16 %v946
        %v1031 = vunpack.c.h.b16 %v946
        %v1032 = vunpack.c.l.b16 %v947
        %v1033 = vunpack.c.l.b16 %v948
        %v1034 = vunpack.c.h.b16 %v948
        %v1035 = vunpack.c.l.b16 %v949
        %v1036 = vunpack.c.l.b16 %v950
        %v1037 = vunpack.c.h.b16 %v950
        %v1038 = vunpack.c.l.b16 %v951
        %v1039 = vunpack.c.l.b16 %v952
        %v1040 = vunpack.c.h.b16 %v952
        %v1041 = vunpack.c.l.b16 %v953
        %v1042 = vpack.c.b16 %v997, %v994
        %v1043 = vpack.c.b16 %v998, %v995
        %v1044 = vpack.c.b16 %v999, %v996
        %v1045 = vpack.c.b16 %v1003, %v1000
        %v1046 = vpack.c.b16 %v1004, %v1001
        %v1047 = vpack.c.b16 %v1005, %v1002
        %v1048 = vpack.c.b16 %v1009, %v1006
        %v1049 = vpack.c.b16 %v1010, %v1007
        %v1050 = vpack.c.b16 %v1011, %v1008
        %v1051 = vpack.c.b16 %v1015, %v1012
        %v1052 = vpack.c.b16 %v1016, %v1013
        %v1053 = vpack.c.b16 %v1017, %v1014
        %v1054 = vpack.c.b16 %v1021, %v1018
        %v1055 = vpack.c.b16 %v1022, %v1019
        %v1056 = vpack.c.b16 %v1023, %v1020
        %v1057 = vpack.c.b16 %v1027, %v1024
        %v1058 = vpack.c.b16 %v1028, %v1025
        %v1059 = vpack.c.b16 %v1029, %v1026
        %v1060 = vpack.c.b16 %v1033, %v1030
        %v1061 = vpack.c.b16 %v1034, %v1031
        %v1062 = vpack.c.b16 %v1035, %v1032
        %v1063 = vpack.c.b16 %v1039, %v1036
        %v1064 = vpack.c.b16 %v1040, %v1037
        %v1065 = vpack.c.b16 %v1041, %v1038
        %1090 = vmatpush.bf16.msra.mxu0 %v1063
        %1091 = vmatpush.bf16.msra.mxu0 %v1060
        %1092 = vmatpush.bf16.msra.mxu0 %v1057
        %1093 = vmatpush.bf16.msra.mxu0 %v1054
        %1094 = vmatpush.bf16.msra.mxu0 %v1051
        %1095 = vmatpush.bf16.msra.mxu0 %v1048
        %1096 = vmatpush.bf16.msra.mxu0 %v1045
        %1097 = vmatpush.bf16.msra.mxu0 %v1042
        %1098 = vmatmul.bf16.gmra.mxu0 %v921
        %v1099 = vpop.f32.mrf.mxu0
        %v1100 = vadd.f32 %v956, %v1099
        %v1101 = vpop.f32.mrf.mxu0
        %v1102 = vadd.f32 %v956, %v1101
        %1103 = vdwg.mxu0
        %1104 = vmatpush.bf16.msra.mxu0 %v1064
        %1105 = vmatpush.bf16.msra.mxu0 %v1061
        %1106 = vmatpush.bf16.msra.mxu0 %v1058
        %1107 = vmatpush.bf16.msra.mxu0 %v1055
        %1108 = vmatpush.bf16.msra.mxu0 %v1052
        %1109 = vmatpush.bf16.msra.mxu0 %v1049
        %1110 = vmatpush.bf16.msra.mxu0 %v1046
        %1111 = vmatpush.bf16.msra.mxu0 %v1043
        %1112 = vmatmul.bf16.gmra.mxu0 %v921
        %v1113 = vpop.f32.mrf.mxu0
        %v1114 = vadd.f32 %v957, %v1113
        %v1115 = vpop.f32.mrf.mxu0
        %v1116 = vadd.f32 %v957, %v1115
        %1117 = vdwg.mxu0
        %1118 = vmatpush.bf16.msra.mxu0 %v1065
        %1119 = vmatpush.bf16.msra.mxu0 %v1062
        %1120 = vmatpush.bf16.msra.mxu0 %v1059
        %1121 = vmatpush.bf16.msra.mxu0 %v1056
        %1122 = vmatpush.bf16.msra.mxu0 %v1053
        %1123 = vmatpush.bf16.msra.mxu0 %v1050
        %1124 = vmatpush.bf16.msra.mxu0 %v1047
        %1125 = vmatpush.bf16.msra.mxu0 %v1044
        %1126 = vmatmul.bf16.gmra.mxu0 %v921
        %v1127 = vpop.f32.mrf.mxu0
        %v1128 = vadd.f32 %v958, %v1127
        %v1129 = vpop.f32.mrf.mxu0
        %v1130 = vadd.f32 %v958, %v1129
        %1131 = vdwg.mxu0
        %1134 = vrot.lane.b32.xlu0 %v1100, 96
        %v1135 = vpop.permute.xlu0 %1134
        %1136 = vrot.lane.b32.xlu0 %v1102, 96
        %v1137 = vpop.permute.xlu0 %1136
        %1140 = vrot.lane.b32.xlu0 %v1100, 64
        %v1141 = vpop.permute.xlu0 %1140
        %1142 = vrot.lane.b32.xlu0 %v1102, 64
        %v1143 = vpop.permute.xlu0 %1142
        %1146 = vrot.lane.b32.xlu0 %v1100, 32
        %v1147 = vpop.permute.xlu0 %1146
        %1148 = vrot.lane.b32.xlu0 %v1102, 32
        %v1149 = vpop.permute.xlu0 %1148
        %v1152 = vmul.f32 %v1100, 0.17677669
        %v1153 = vmul.f32 %v1102, 0.17677669
        %v1154 = vmul.f32 %v1135, 0.17677669
        %v1155 = vmul.f32 %v1137, 0.17677669
        %v1156 = vmul.f32 %v1141, 0.17677669
        %v1157 = vmul.f32 %v1143, 0.17677669
        %v1158 = vmul.f32 %v1147, 0.17677669
        %v1159 = vmul.f32 %v1149, 0.17677669
        %1162 = vrot.lane.b32.xlu0 %v1114, 96
        %v1163 = vpop.permute.xlu0 %1162
        %1164 = vrot.lane.b32.xlu0 %v1116, 96
        %v1165 = vpop.permute.xlu0 %1164
        %1168 = vrot.lane.b32.xlu0 %v1114, 64
        %v1169 = vpop.permute.xlu0 %1168
        %1170 = vrot.lane.b32.xlu0 %v1116, 64
        %v1171 = vpop.permute.xlu0 %1170
        %1174 = vrot.lane.b32.xlu0 %v1114, 32
        %v1175 = vpop.permute.xlu0 %1174
        %1176 = vrot.lane.b32.xlu0 %v1116, 32
        %v1177 = vpop.permute.xlu0 %1176
        %1182 = vrot.lane.b32.xlu0 %v1128, 96
        %v1183 = vpop.permute.xlu0 %1182
        %1184 = vrot.lane.b32.xlu0 %v1130, 96
        %v1185 = vpop.permute.xlu0 %1184
        %1188 = vrot.lane.b32.xlu0 %v1128, 64
        %v1189 = vpop.permute.xlu0 %1188
        %1190 = vrot.lane.b32.xlu0 %v1130, 64
        %v1191 = vpop.permute.xlu0 %1190
        %1194 = vrot.lane.b32.xlu0 %v1128, 32
        %v1195 = vpop.permute.xlu0 %1194
        %1196 = vrot.lane.b32.xlu0 %v1130, 32
        %v1197 = vpop.permute.xlu0 %1196
        %v1200 = vlaneseq
        %v1201 = vshrl.u32 %v1200, 7
        %v1202 = vadd.s32 %v1201, 8
        %v1203 = vlaneseq
        %v1204 = vand.u32 %v1203, 127
        %vm1205 = vcmp.le.s32.totalorder %v1204, %v1201
        %vm1206 = vcmp.le.s32.totalorder %v1204, %v1202
        %v1207 = vld [vmem:[%s819] sm:$0x1]
        %vm1208 = vcmp.gt.f32.partialorder %v1207, 0.5
        %v1209 = vsel %vm1208, 1, 0
        %v1210 = vperm.slane %v1209, 0
        %vm1211 = vcmp.eq.s32.totalorder %v1210, 1
        %vm1212 = vmand %vm1205, %vm1211
        %vm1213 = vmand %vm1206, %vm1211
        %v1214 = vpack.c.bf16 %v1152, %v1152
        %v1215 = vpack.c.bf16 %v1153, %v1153
        %v1216 = vpack.c.bf16 %v1154, %v1154
        %v1217 = vpack.c.bf16 %v1155, %v1155
        %v1218 = vpack.c.bf16 %v1156, %v1156
        %v1219 = vpack.c.bf16 %v1157, %v1157
        %v1220 = vpack.c.bf16 %v1158, %v1158
        %v1221 = vpack.c.bf16 %v1159, %v1159
        %v1222 = vpack.c.bf16 %v1114, %v1114
        %v1223 = vpack.c.bf16 %v1116, %v1116
        %v1224 = vpack.c.bf16 %v1163, %v1163
        %v1225 = vpack.c.bf16 %v1165, %v1165
        %v1226 = vpack.c.bf16 %v1169, %v1169
        %v1227 = vpack.c.bf16 %v1171, %v1171
        %v1228 = vpack.c.bf16 %v1175, %v1175
        %v1229 = vpack.c.bf16 %v1177, %v1177
        %v1232 = vunpack.c.l.b16 %v1214
        %v1233 = vunpack.c.l.b16 %v1215
        %v1234 = vpack.c.b16 %v1233, %v1232
        %v1237 = vunpack.c.l.b16 %v1222
        %v1238 = vunpack.c.l.b16 %v1223
        %v1239 = vpack.c.b16 %v1238, %v1237
        %vm1240 = vcmask 261120
        %v1242 = vsel %vm1240, %v1234, 0
        %v1245 = vsel %vm1240, %v1239, 0
        %1247 = vmatpush.bf16.xpose.msra.mxu0 0
        %1248 = vmatpush.bf16.xpose.msra.mxu0 0
        %1249 = vmatpush.bf16.xpose.msra.mxu0 0
        %1250 = vmatpush.bf16.xpose.msra.mxu0 0
        %1251 = vmatpush.bf16.xpose.msra.mxu0 0
        %1252 = vmatpush.bf16.xpose.msra.mxu0 0
        %1253 = vmatpush.bf16.xpose.msra.mxu0 0
        %1254 = vmatpush.bf16.xpose.msra.mxu0 %v1245
        %1255 = vmatmul.bf16.gmra.mxu0 %v1242
        %v1256 = vpop.f32.mrf.mxu0
        %v1257 = vadd.f32 0.0, %v1256
        %v1258 = vpop.f32.mrf.mxu0
        %v1259 = vadd.f32 0.0, %v1258
        %1260 = vdwg.mxu0
        %v1263 = vunpack.c.l.b16 %v1216
        %v1264 = vunpack.c.l.b16 %v1217
        %v1265 = vpack.c.b16 %v1264, %v1263
        %v1268 = vunpack.c.l.b16 %v1224
        %v1269 = vunpack.c.l.b16 %v1225
        %v1270 = vpack.c.b16 %v1269, %v1268
        %v1272 = vsel %vm1240, %v1265, 0
        %v1275 = vsel %vm1240, %v1270, 0
        %1277 = vmatpush.bf16.xpose.msra.mxu0 0
        %1278 = vmatpush.bf16.xpose.msra.mxu0 0
        %1279 = vmatpush.bf16.xpose.msra.mxu0 0
        %1280 = vmatpush.bf16.xpose.msra.mxu0 0
        %1281 = vmatpush.bf16.xpose.msra.mxu0 0
        %1282 = vmatpush.bf16.xpose.msra.mxu0 0
        %1283 = vmatpush.bf16.xpose.msra.mxu0 0
        %1284 = vmatpush.bf16.xpose.msra.mxu0 %v1275
        %1285 = vmatmul.bf16.gmra.mxu0 %v1272
        %v1286 = vpop.f32.mrf.mxu0
        %v1287 = vadd.f32 0.0, %v1286
        %v1288 = vpop.f32.mrf.mxu0
        %v1289 = vadd.f32 0.0, %v1288
        %1290 = vdwg.mxu0
        %v1293 = vunpack.c.l.b16 %v1218
        %v1294 = vunpack.c.l.b16 %v1219
        %v1295 = vpack.c.b16 %v1294, %v1293
        %v1298 = vunpack.c.l.b16 %v1226
        %v1299 = vunpack.c.l.b16 %v1227
        %v1300 = vpack.c.b16 %v1299, %v1298
        %v1302 = vsel %vm1240, %v1295, 0
        %v1305 = vsel %vm1240, %v1300, 0
        %1307 = vmatpush.bf16.xpose.msra.mxu0 0
        %1308 = vmatpush.bf16.xpose.msra.mxu0 0
        %1309 = vmatpush.bf16.xpose.msra.mxu0 0
        %1310 = vmatpush.bf16.xpose.msra.mxu0 0
        %1311 = vmatpush.bf16.xpose.msra.mxu0 0
        %1312 = vmatpush.bf16.xpose.msra.mxu0 0
        %1313 = vmatpush.bf16.xpose.msra.mxu0 0
        %1314 = vmatpush.bf16.xpose.msra.mxu0 %v1305
        %1315 = vmatmul.bf16.gmra.mxu0 %v1302
        %v1316 = vpop.f32.mrf.mxu0
        %v1317 = vadd.f32 0.0, %v1316
        %v1318 = vpop.f32.mrf.mxu0
        %v1319 = vadd.f32 0.0, %v1318
        %1320 = vdwg.mxu0
        %v1323 = vunpack.c.l.b16 %v1220
        %v1324 = vunpack.c.l.b16 %v1221
        %v1325 = vpack.c.b16 %v1324, %v1323
        %v1328 = vunpack.c.l.b16 %v1228
        %v1329 = vunpack.c.l.b16 %v1229
        %v1330 = vpack.c.b16 %v1329, %v1328
        %v1332 = vsel %vm1240, %v1325, 0
        %v1335 = vsel %vm1240, %v1330, 0
        %1337 = vmatpush.bf16.xpose.msra.mxu0 0
        %1338 = vmatpush.bf16.xpose.msra.mxu0 0
        %1339 = vmatpush.bf16.xpose.msra.mxu0 0
        %1340 = vmatpush.bf16.xpose.msra.mxu0 0
        %1341 = vmatpush.bf16.xpose.msra.mxu0 0
        %1342 = vmatpush.bf16.xpose.msra.mxu0 0
        %1343 = vmatpush.bf16.xpose.msra.mxu0 0
        %1344 = vmatpush.bf16.xpose.msra.mxu0 %v1335
        %1345 = vmatmul.bf16.gmra.mxu0 %v1332
        %v1346 = vpop.f32.mrf.mxu0
        %v1347 = vadd.f32 0.0, %v1346
        %v1348 = vpop.f32.mrf.mxu0
        %v1349 = vadd.f32 0.0, %v1348
        %1350 = vdwg.mxu0
        %v1351 = vsel %vm1212, 1, 0
        %v1352 = vsel %vm1213, 1, 0
        %vm1353 = vcmp.eq.s32.totalorder %v1351, 1
        %vm1354 = vcmp.eq.s32.totalorder %v1352, 1
        %v1355 = vsel %vm1353, %v1257, -1e+30
        %v1356 = vsel %vm1354, %v1259, -1e+30
        %v1357 = vsel %vm1353, %v1287, -1e+30
        %v1358 = vsel %vm1354, %v1289, -1e+30
        %v1359 = vsel %vm1353, %v1317, -1e+30
        %v1360 = vsel %vm1354, %v1319, -1e+30
        %v1361 = vsel %vm1353, %v1347, -1e+30
        %v1362 = vsel %vm1354, %v1349, -1e+30
        %vm1363 = vcmask 130048
        %v1364 = vsel %vm1363, %v1355, -inf
        %1365 = vmax.xlane.f32.xlu0 %v1364
        %v1366 = vpop.xlane.xlu0 %1365
        %v1367 = vsel %vm1363, %v1356, -inf
        %1368 = vmax.xlane.f32.xlu0 %v1367
        %v1369 = vpop.xlane.xlu0 %1368
        %v1370 = vsel %vm1363, %v1357, -inf
        %1371 = vmax.xlane.f32.xlu0 %v1370
        %v1372 = vpop.xlane.xlu0 %1371
        %v1373 = vsel %vm1363, %v1358, -inf
        %1374 = vmax.xlane.f32.xlu0 %v1373
        %v1375 = vpop.xlane.xlu0 %1374
        %v1376 = vsel %vm1363, %v1359, -inf
        %1377 = vmax.xlane.f32.xlu0 %v1376
        %v1378 = vpop.xlane.xlu0 %1377
        %v1379 = vsel %vm1363, %v1360, -inf
        %1380 = vmax.xlane.f32.xlu0 %v1379
        %v1381 = vpop.xlane.xlu0 %1380
        %v1382 = vsel %vm1363, %v1361, -inf
        %1383 = vmax.xlane.f32.xlu0 %v1382
        %v1384 = vpop.xlane.xlu0 %1383
        %v1385 = vsel %vm1363, %v1362, -inf
        %1386 = vmax.xlane.f32.xlu0 %v1385
        %v1387 = vpop.xlane.xlu0 %1386
        %v1388 = vsub.f32 %v1355, %v1366
        %v1389 = vsub.f32 %v1356, %v1369
        %v1390 = vsub.f32 %v1357, %v1372
        %v1391 = vsub.f32 %v1358, %v1375
        %v1392 = vsub.f32 %v1359, %v1378
        %v1393 = vsub.f32 %v1360, %v1381
        %v1394 = vsub.f32 %v1361, %v1384
        %v1395 = vsub.f32 %v1362, %v1387
        %v1396 = vmul.f32 %v1388, 1.442695
        %v1397 = vpow.pop %v1396
        %v1398 = vmul.f32 %v1389, 1.442695
        %v1399 = vpow.pop %v1398
        %v1400 = vmul.f32 %v1390, 1.442695
        %v1401 = vpow.pop %v1400
        %v1402 = vmul.f32 %v1391, 1.442695
        %v1403 = vpow.pop %v1402
        %v1404 = vmul.f32 %v1392, 1.442695
        %v1405 = vpow.pop %v1404
        %v1406 = vmul.f32 %v1393, 1.442695
        %v1407 = vpow.pop %v1406
        %v1408 = vmul.f32 %v1394, 1.442695
        %v1409 = vpow.pop %v1408
        %v1410 = vmul.f32 %v1395, 1.442695
        %v1411 = vpow.pop %v1410
        %v1412 = vsel %vm1363, %v1397, 0.0
        %1413 = vadd.xlane.f32.xlu0 %v1412
        %v1414 = vpop.xlane.xlu0 %1413
        %v1415 = vsel %vm1363, %v1399, 0.0
        %1416 = vadd.xlane.f32.xlu0 %v1415
        %v1417 = vpop.xlane.xlu0 %1416
        %v1418 = vsel %vm1363, %v1401, 0.0
        %1419 = vadd.xlane.f32.xlu0 %v1418
        %v1420 = vpop.xlane.xlu0 %1419
        %v1421 = vsel %vm1363, %v1403, 0.0
        %1422 = vadd.xlane.f32.xlu0 %v1421
        %v1423 = vpop.xlane.xlu0 %1422
        %v1424 = vsel %vm1363, %v1405, 0.0
        %1425 = vadd.xlane.f32.xlu0 %v1424
        %v1426 = vpop.xlane.xlu0 %1425
        %v1427 = vsel %vm1363, %v1407, 0.0
        %1428 = vadd.xlane.f32.xlu0 %v1427
        %v1429 = vpop.xlane.xlu0 %1428
        %v1430 = vsel %vm1363, %v1409, 0.0
        %1431 = vadd.xlane.f32.xlu0 %v1430
        %v1432 = vpop.xlane.xlu0 %1431
        %v1433 = vsel %vm1363, %v1411, 0.0
        %1434 = vadd.xlane.f32.xlu0 %v1433
        %v1435 = vpop.xlane.xlu0 %1434
        %v1436 = vrcp.pop %v1414
        %v1437 = vrcp.pop %v1417
        %v1438 = vrcp.pop %v1420
        %v1439 = vrcp.pop %v1423
        %v1440 = vrcp.pop %v1426
        %v1441 = vrcp.pop %v1429
        %v1442 = vrcp.pop %v1432
        %v1443 = vrcp.pop %v1435
        %v1444 = vmul.f32 %v1397, %v1436
        %v1445 = vmul.f32 %v1399, %v1437
        %v1446 = vmul.f32 %v1401, %v1438
        %v1447 = vmul.f32 %v1403, %v1439
        %v1448 = vmul.f32 %v1405, %v1440
        %v1449 = vmul.f32 %v1407, %v1441
        %v1450 = vmul.f32 %v1409, %v1442
        %v1451 = vmul.f32 %v1411, %v1443
        %v1452 = vpack.c.bf16 %v1444, %v1444
        %v1453 = vpack.c.bf16 %v1445, %v1445
        %v1454 = vpack.c.bf16 %v1446, %v1446
        %v1455 = vpack.c.bf16 %v1447, %v1447
        %v1456 = vpack.c.bf16 %v1448, %v1448
        %v1457 = vpack.c.bf16 %v1449, %v1449
        %v1458 = vpack.c.bf16 %v1450, %v1450
        %v1459 = vpack.c.bf16 %v1451, %v1451
        %v1460 = vpack.c.bf16 %v1128, %v1128
        %v1461 = vpack.c.bf16 %v1130, %v1130
        %v1462 = vpack.c.bf16 %v1183, %v1183
        %v1463 = vpack.c.bf16 %v1185, %v1185
        %v1464 = vpack.c.bf16 %v1189, %v1189
        %v1465 = vpack.c.bf16 %v1191, %v1191
        %v1466 = vpack.c.bf16 %v1195, %v1195
        %v1467 = vpack.c.bf16 %v1197, %v1197
        %v1470 = vunpack.c.l.b16 %v1452
        %v1471 = vunpack.c.l.b16 %v1453
        %v1472 = vpack.c.b16 %v1471, %v1470
        %v1475 = vunpack.c.l.b16 %v1460
        %v1476 = vunpack.c.l.b16 %v1461
        %v1477 = vpack.c.b16 %v1476, %v1475
        %v1480 = vsel %vm1363, %v1472, 0
        %1482 = vmatpush.bf16.msra.mxu0 0
        %1483 = vmatpush.bf16.msra.mxu0 0
        %1484 = vmatpush.bf16.msra.mxu0 0
        %1485 = vmatpush.bf16.msra.mxu0 0
        %1486 = vmatpush.bf16.msra.mxu0 0
        %1487 = vmatpush.bf16.msra.mxu0 0
        %1488 = vmatpush.bf16.msra.mxu0 0
        %1489 = vmatpush.bf16.msra.mxu0 %v1477
        %1490 = vmatmul.bf16.gmra.mxu0 %v1480
        %v1491 = vpop.f32.mrf.mxu0
        %v1492 = vadd.f32 0.0, %v1491
        %v1493 = vpop.f32.mrf.mxu0
        %v1494 = vadd.f32 0.0, %v1493
        %1495 = vdwg.mxu0
        %v1498 = vunpack.c.l.b16 %v1454
        %v1499 = vunpack.c.l.b16 %v1455
        %v1500 = vpack.c.b16 %v1499, %v1498
        %v1503 = vunpack.c.l.b16 %v1462
        %v1504 = vunpack.c.l.b16 %v1463
        %v1505 = vpack.c.b16 %v1504, %v1503
        %v1508 = vsel %vm1363, %v1500, 0
        %1510 = vmatpush.bf16.msra.mxu0 0
        %1511 = vmatpush.bf16.msra.mxu0 0
        %1512 = vmatpush.bf16.msra.mxu0 0
        %1513 = vmatpush.bf16.msra.mxu0 0
        %1514 = vmatpush.bf16.msra.mxu0 0
        %1515 = vmatpush.bf16.msra.mxu0 0
        %1516 = vmatpush.bf16.msra.mxu0 0
        %1517 = vmatpush.bf16.msra.mxu0 %v1505
        %1518 = vmatmul.bf16.gmra.mxu0 %v1508
        %v1519 = vpop.f32.mrf.mxu0
        %v1520 = vadd.f32 0.0, %v1519
        %v1521 = vpop.f32.mrf.mxu0
        %v1522 = vadd.f32 0.0, %v1521
        %1523 = vdwg.mxu0
        %v1526 = vunpack.c.l.b16 %v1456
        %v1527 = vunpack.c.l.b16 %v1457
        %v1528 = vpack.c.b16 %v1527, %v1526
        %v1531 = vunpack.c.l.b16 %v1464
        %v1532 = vunpack.c.l.b16 %v1465
        %v1533 = vpack.c.b16 %v1532, %v1531
        %v1536 = vsel %vm1363, %v1528, 0
        %1538 = vmatpush.bf16.msra.mxu0 0
        %1539 = vmatpush.bf16.msra.mxu0 0
        %1540 = vmatpush.bf16.msra.mxu0 0
        %1541 = vmatpush.bf16.msra.mxu0 0
        %1542 = vmatpush.bf16.msra.mxu0 0
        %1543 = vmatpush.bf16.msra.mxu0 0
        %1544 = vmatpush.bf16.msra.mxu0 0
        %1545 = vmatpush.bf16.msra.mxu0 %v1533
        %1546 = vmatmul.bf16.gmra.mxu0 %v1536
        %v1547 = vpop.f32.mrf.mxu0
        %v1548 = vadd.f32 0.0, %v1547
        %v1549 = vpop.f32.mrf.mxu0
        %v1550 = vadd.f32 0.0, %v1549
        %1551 = vdwg.mxu0
        %v1554 = vunpack.c.l.b16 %v1458
        %v1555 = vunpack.c.l.b16 %v1459
        %v1556 = vpack.c.b16 %v1555, %v1554
        %v1559 = vunpack.c.l.b16 %v1466
        %v1560 = vunpack.c.l.b16 %v1467
        %v1561 = vpack.c.b16 %v1560, %v1559
        %v1564 = vsel %vm1363, %v1556, 0
        %1566 = vmatpush.bf16.msra.mxu0 0
        %1567 = vmatpush.bf16.msra.mxu0 0
        %1568 = vmatpush.bf16.msra.mxu0 0
        %1569 = vmatpush.bf16.msra.mxu0 0
        %1570 = vmatpush.bf16.msra.mxu0 0
        %1571 = vmatpush.bf16.msra.mxu0 0
        %1572 = vmatpush.bf16.msra.mxu0 0
        %1573 = vmatpush.bf16.msra.mxu0 %v1561
        %1574 = vmatmul.bf16.gmra.mxu0 %v1564
        %v1575 = vpop.f32.mrf.mxu0
        %v1576 = vadd.f32 0.0, %v1575
        %v1577 = vpop.f32.mrf.mxu0
        %v1578 = vadd.f32 0.0, %v1577
        %1579 = vdwg.mxu0
        %1582 = vrot.lane.b32.xlu0 %v1520, 32
        %v1583 = vpop.permute.xlu0 %1582
        %1584 = vrot.lane.b32.xlu0 %v1522, 32
        %v1585 = vpop.permute.xlu0 %1584
        %1590 = vrot.lane.b32.xlu0 %v1548, 64
        %v1591 = vpop.permute.xlu0 %1590
        %1592 = vrot.lane.b32.xlu0 %v1550, 64
        %v1593 = vpop.permute.xlu0 %1592
        %1598 = vrot.lane.b32.xlu0 %v1576, 96
        %v1599 = vpop.permute.xlu0 %1598
        %1600 = vrot.lane.b32.xlu0 %v1578, 96
        %v1601 = vpop.permute.xlu0 %1600
        %v1604 = vsel %vm1240, %v1492, %v1583
        %v1605 = vsel %vm1240, %v1494, %v1585
        %vm1606 = vcmask 523264
        %v1607 = vsel %vm1606, %v1604, %v1591
        %v1608 = vsel %vm1606, %v1605, %v1593
        %vm1609 = vcmask 785408
        %v1610 = vsel %vm1609, %v1607, %v1599
        %v1611 = vsel %vm1609, %v1608, %v1601
        %v1612 = vpack.c.bf16 %v1611, %v1610
        %v1613 = vld [vmem:[%s696] sm:$0xf]
        %v1614 = vld [vmem:[%s696 + $0x4] sm:$0xf]
        %v1615 = vld [vmem:[%s696 + $0x8] sm:$0xf]
        %v1616 = vld [vmem:[%s696 + $0xc] sm:$0xf]
        %v1617 = vld [vmem:[%s696 + $0x10] sm:$0xf]
        %v1618 = vld [vmem:[%s696 + $0x14] sm:$0xf]
        %v1619 = vld [vmem:[%s696 + $0x18] sm:$0xf]
        %v1620 = vld [vmem:[%s696 + $0x1c] sm:$0xf]
        %v1621 = vld [vmem:[%s696 + $0x20] sm:$0xf]
        %v1622 = vld [vmem:[%s696 + $0x24] sm:$0xf]
        %v1623 = vld [vmem:[%s696 + $0x28] sm:$0xf]
        %v1624 = vld [vmem:[%s696 + $0x2c] sm:$0xf]
        %v1625 = vld [vmem:[%s696 + $0x30] sm:$0xf]
        %v1626 = vld [vmem:[%s696 + $0x34] sm:$0xf]
        %v1627 = vld [vmem:[%s696 + $0x38] sm:$0xf]
        %v1628 = vld [vmem:[%s696 + $0x3c] sm:$0xf]
        %v1629 = vld [vmem:[%s832] sm:$0x1]
        %v1631 = vperm.slane %v1629, 0
        %v1649 = vunpack.c.l.b16 %v1613
        %v1650 = vunpack.c.l.b16 %v1614
        %v1651 = vunpack.c.l.b16 %v1615
        %v1652 = vunpack.c.l.b16 %v1616
        %v1653 = vunpack.c.l.b16 %v1617
        %v1654 = vunpack.c.l.b16 %v1618
        %v1655 = vunpack.c.l.b16 %v1619
        %v1656 = vunpack.c.l.b16 %v1620
        %v1657 = vunpack.c.l.b16 %v1621
        %v1658 = vunpack.c.l.b16 %v1622
        %v1659 = vunpack.c.l.b16 %v1623
        %v1660 = vunpack.c.l.b16 %v1624
        %v1661 = vunpack.c.l.b16 %v1625
        %v1662 = vunpack.c.l.b16 %v1626
        %v1663 = vunpack.c.l.b16 %v1627
        %v1664 = vunpack.c.l.b16 %v1628
        %v1665 = vpack.c.b16 %v1650, %v1649
        %v1666 = vpack.c.b16 %v1652, %v1651
        %v1667 = vpack.c.b16 %v1654, %v1653
        %v1668 = vpack.c.b16 %v1656, %v1655
        %v1669 = vpack.c.b16 %v1658, %v1657
        %v1670 = vpack.c.b16 %v1660, %v1659
        %v1671 = vpack.c.b16 %v1662, %v1661
        %v1672 = vpack.c.b16 %v1664, %v1663
        %1681 = vmatpush.bf16.msra.mxu0 %v1672
        %1682 = vmatpush.bf16.msra.mxu0 %v1671
        %1683 = vmatpush.bf16.msra.mxu0 %v1670
        %1684 = vmatpush.bf16.msra.mxu0 %v1669
        %1685 = vmatpush.bf16.msra.mxu0 %v1668
        %1686 = vmatpush.bf16.msra.mxu0 %v1667
        %1687 = vmatpush.bf16.msra.mxu0 %v1666
        %1688 = vmatpush.bf16.msra.mxu0 %v1665
        %1689 = vmatmul.bf16.gmra.mxu0 %v1612
        %v1690 = vpop.f32.mrf.mxu0
        %v1691 = vadd.f32 %v1631, %v1690
        %v1692 = vpop.f32.mrf.mxu0
        %v1693 = vadd.f32 %v1631, %v1692
        %1694 = vdwg.mxu0
        %v1695 = vadd.f32 %v860, %v1691
        %v1696 = vadd.f32 %v861, %v1693
        %v1697 = vld [vmem:[%s835] sm:$0x1]
        %v1698 = vld [vmem:[%s838] sm:$0x1]
        %1699 = vadd.xlane.f32.xlu0 %v1695
        %v1700 = vpop.xlane.xlu0 %1699
        %1701 = vadd.xlane.f32.xlu0 %v1696
        %v1702 = vpop.xlane.xlu0 %1701
        %v1703 = vmul.f32 %v1700, %v874
        %v1704 = vmul.f32 %v1702, %v874
        %v1705 = vsub.f32 %v1695, %v1703
        %v1706 = vsub.f32 %v1696, %v1704
        %v1707 = vmul.f32 %v1705, %v1705
        %v1708 = vmul.f32 %v1706, %v1706
        %1709 = vadd.xlane.f32.xlu0 %v1707
        %v1710 = vpop.xlane.xlu0 %1709
        %1711 = vadd.xlane.f32.xlu0 %v1708
        %v1712 = vpop.xlane.xlu0 %1711
        %v1713 = vmul.f32 %v1710, %v874
        %v1714 = vmul.f32 %v1712, %v874
        %v1715 = vadd.f32 %v1713, 1e-05
        %v1716 = vadd.f32 %v1714, 1e-05
        %v1717 = vrsqrt.pop %v1715
        %v1718 = vmul.f32 %v1717, %v1715
        %v1719 = vmul.f32 %v1718, %v1717
        %v1720 = vmul.f32 0.5, %v1719
        %v1721 = vsub.f32 1.5, %v1720
        %v1722 = vmul.f32 %v1717, %v1721
        %vm1723 = vweird.f32 %v1715
        %vm1724 = vweird.f32 %v1717
        %vm1725 = vmor %vm1723, %vm1724
        %v1726 = vsel %vm1725, %v1717, %v1722
        %v1727 = vrsqrt.pop %v1716
        %v1728 = vmul.f32 %v1727, %v1716
        %v1729 = vmul.f32 %v1728, %v1727
        %v1730 = vmul.f32 0.5, %v1729
        %v1731 = vsub.f32 1.5, %v1730
        %v1732 = vmul.f32 %v1727, %v1731
        %vm1733 = vweird.f32 %v1716
        %vm1734 = vweird.f32 %v1727
        %vm1735 = vmor %vm1733, %vm1734
        %v1736 = vsel %vm1735, %v1727, %v1732
        %v1737 = vmul.f32 %v1705, %v1726
        %v1738 = vmul.f32 %v1706, %v1736
        %v1740 = vperm.slane %v1697, 0
        %v1742 = vmul.f32 %v1737, %v1740
        %v1743 = vmul.f32 %v1738, %v1740
        %v1745 = vperm.slane %v1698, 0
        %v1747 = vadd.f32 %v1742, %v1745
        %v1748 = vadd.f32 %v1743, %v1745
        %v1749 = vpack.c.bf16 %v1748, %v1747
        %v1750 = vld [vmem:[%s843] sm:$0xff]
        %v1751 = vld [vmem:[%s843 + $0x8] sm:$0xff]
        %v1752 = vld [vmem:[%s843 + $0x10] sm:$0xff]
        %v1753 = vld [vmem:[%s843 + $0x18] sm:$0xff]
        %v1754 = vld [vmem:[%s843 + $0x20] sm:$0xff]
        %v1755 = vld [vmem:[%s843 + $0x28] sm:$0xff]
        %v1756 = vld [vmem:[%s843 + $0x30] sm:$0xff]
        %v1757 = vld [vmem:[%s843 + $0x38] sm:$0xff]
        %v1758 = vld [vmem:[%s843 + $0x40] sm:$0xff]
        %v1759 = vld [vmem:[%s843 + $0x48] sm:$0xff]
        %v1760 = vld [vmem:[%s843 + $0x50] sm:$0xff]
        %v1761 = vld [vmem:[%s843 + $0x58] sm:$0xff]
        %v1762 = vld [vmem:[%s843 + $0x60] sm:$0xff]
        %v1763 = vld [vmem:[%s843 + $0x68] sm:$0xff]
        %v1764 = vld [vmem:[%s843 + $0x70] sm:$0xff]
        %v1765 = vld [vmem:[%s843 + $0x78] sm:$0xff]
        %v1766 = vld [vmem:[%s843 + $0x80] sm:$0xff]
        %v1767 = vld [vmem:[%s843 + $0x88] sm:$0xff]
        %v1768 = vld [vmem:[%s843 + $0x90] sm:$0xff]
        %v1769 = vld [vmem:[%s843 + $0x98] sm:$0xff]
        %v1770 = vld [vmem:[%s843 + $0xa0] sm:$0xff]
        %v1771 = vld [vmem:[%s843 + $0xa8] sm:$0xff]
        %v1772 = vld [vmem:[%s843 + $0xb0] sm:$0xff]
        %v1773 = vld [vmem:[%s843 + $0xb8] sm:$0xff]
        %v1774 = vld [vmem:[%s843 + $0xc0] sm:$0xff]
        %v1775 = vld [vmem:[%s843 + $0xc8] sm:$0xff]
        %v1776 = vld [vmem:[%s843 + $0xd0] sm:$0xff]
        %v1777 = vld [vmem:[%s843 + $0xd8] sm:$0xff]
        %v1778 = vld [vmem:[%s843 + $0xe0] sm:$0xff]
        %v1779 = vld [vmem:[%s843 + $0xe8] sm:$0xff]
        %v1780 = vld [vmem:[%s843 + $0xf0] sm:$0xff]
        %v1781 = vld [vmem:[%s843 + $0xf8] sm:$0xff]
        %v1782 = vld [vmem:[%s847] sm:$0xf]
        %v1784 = vperm.slane %v1782, 0
        %v1785 = vperm.slane %v1782, 1
        %v1786 = vperm.slane %v1782, 2
        %v1787 = vperm.slane %v1782, 3
        %v1824 = vunpack.c.l.b16 %v1750
        %v1825 = vunpack.c.h.b16 %v1750
        %v1826 = vunpack.c.l.b16 %v1751
        %v1827 = vunpack.c.h.b16 %v1751
        %v1828 = vunpack.c.l.b16 %v1752
        %v1829 = vunpack.c.h.b16 %v1752
        %v1830 = vunpack.c.l.b16 %v1753
        %v1831 = vunpack.c.h.b16 %v1753
        %v1832 = vunpack.c.l.b16 %v1754
        %v1833 = vunpack.c.h.b16 %v1754
        %v1834 = vunpack.c.l.b16 %v1755
        %v1835 = vunpack.c.h.b16 %v1755
        %v1836 = vunpack.c.l.b16 %v1756
        %v1837 = vunpack.c.h.b16 %v1756
        %v1838 = vunpack.c.l.b16 %v1757
        %v1839 = vunpack.c.h.b16 %v1757
        %v1840 = vunpack.c.l.b16 %v1758
        %v1841 = vunpack.c.h.b16 %v1758
        %v1842 = vunpack.c.l.b16 %v1759
        %v1843 = vunpack.c.h.b16 %v1759
        %v1844 = vunpack.c.l.b16 %v1760
        %v1845 = vunpack.c.h.b16 %v1760
        %v1846 = vunpack.c.l.b16 %v1761
        %v1847 = vunpack.c.h.b16 %v1761
        %v1848 = vunpack.c.l.b16 %v1762
        %v1849 = vunpack.c.h.b16 %v1762
        %v1850 = vunpack.c.l.b16 %v1763
        %v1851 = vunpack.c.h.b16 %v1763
        %v1852 = vunpack.c.l.b16 %v1764
        %v1853 = vunpack.c.h.b16 %v1764
        %v1854 = vunpack.c.l.b16 %v1765
        %v1855 = vunpack.c.h.b16 %v1765
        %v1856 = vunpack.c.l.b16 %v1766
        %v1857 = vunpack.c.h.b16 %v1766
        %v1858 = vunpack.c.l.b16 %v1767
        %v1859 = vunpack.c.h.b16 %v1767
        %v1860 = vunpack.c.l.b16 %v1768
        %v1861 = vunpack.c.h.b16 %v1768
        %v1862 = vunpack.c.l.b16 %v1769
        %v1863 = vunpack.c.h.b16 %v1769
        %v1864 = vunpack.c.l.b16 %v1770
        %v1865 = vunpack.c.h.b16 %v1770
        %v1866 = vunpack.c.l.b16 %v1771
        %v1867 = vunpack.c.h.b16 %v1771
        %v1868 = vunpack.c.l.b16 %v1772
        %v1869 = vunpack.c.h.b16 %v1772
        %v1870 = vunpack.c.l.b16 %v1773
        %v1871 = vunpack.c.h.b16 %v1773
        %v1872 = vunpack.c.l.b16 %v1774
        %v1873 = vunpack.c.h.b16 %v1774
        %v1874 = vunpack.c.l.b16 %v1775
        %v1875 = vunpack.c.h.b16 %v1775
        %v1876 = vunpack.c.l.b16 %v1776
        %v1877 = vunpack.c.h.b16 %v1776
        %v1878 = vunpack.c.l.b16 %v1777
        %v1879 = vunpack.c.h.b16 %v1777
        %v1880 = vunpack.c.l.b16 %v1778
        %v1881 = vunpack.c.h.b16 %v1778
        %v1882 = vunpack.c.l.b16 %v1779
        %v1883 = vunpack.c.h.b16 %v1779
        %v1884 = vunpack.c.l.b16 %v1780
        %v1885 = vunpack.c.h.b16 %v1780
        %v1886 = vunpack.c.l.b16 %v1781
        %v1887 = vunpack.c.h.b16 %v1781
        %v1888 = vpack.c.b16 %v1828, %v1824
        %v1889 = vpack.c.b16 %v1829, %v1825
        %v1890 = vpack.c.b16 %v1830, %v1826
        %v1891 = vpack.c.b16 %v1831, %v1827
        %v1892 = vpack.c.b16 %v1836, %v1832
        %v1893 = vpack.c.b16 %v1837, %v1833
        %v1894 = vpack.c.b16 %v1838, %v1834
        %v1895 = vpack.c.b16 %v1839, %v1835
        %v1896 = vpack.c.b16 %v1844, %v1840
        %v1897 = vpack.c.b16 %v1845, %v1841
        %v1898 = vpack.c.b16 %v1846, %v1842
        %v1899 = vpack.c.b16 %v1847, %v1843
        %v1900 = vpack.c.b16 %v1852, %v1848
        %v1901 = vpack.c.b16 %v1853, %v1849
        %v1902 = vpack.c.b16 %v1854, %v1850
        %v1903 = vpack.c.b16 %v1855, %v1851
        %v1904 = vpack.c.b16 %v1860, %v1856
        %v1905 = vpack.c.b16 %v1861, %v1857
        %v1906 = vpack.c.b16 %v1862, %v1858
        %v1907 = vpack.c.b16 %v1863, %v1859
        %v1908 = vpack.c.b16 %v1868, %v1864
        %v1909 = vpack.c.b16 %v1869, %v1865
        %v1910 = vpack.c.b16 %v1870, %v1866
        %v1911 = vpack.c.b16 %v1871, %v1867
        %v1912 = vpack.c.b16 %v1876, %v1872
        %v1913 = vpack.c.b16 %v1877, %v1873
        %v1914 = vpack.c.b16 %v1878, %v1874
        %v1915 = vpack.c.b16 %v1879, %v1875
        %v1916 = vpack.c.b16 %v1884, %v1880
        %v1917 = vpack.c.b16 %v1885, %v1881
        %v1918 = vpack.c.b16 %v1886, %v1882
        %v1919 = vpack.c.b16 %v1887, %v1883
        %1952 = vmatpush.bf16.msra.mxu0 %v1916
        %1953 = vmatpush.bf16.msra.mxu0 %v1912
        %1954 = vmatpush.bf16.msra.mxu0 %v1908
        %1955 = vmatpush.bf16.msra.mxu0 %v1904
        %1956 = vmatpush.bf16.msra.mxu0 %v1900
        %1957 = vmatpush.bf16.msra.mxu0 %v1896
        %1958 = vmatpush.bf16.msra.mxu0 %v1892
        %1959 = vmatpush.bf16.msra.mxu0 %v1888
        %1960 = vmatmul.bf16.gmra.mxu0 %v1749
        %v1961 = vpop.f32.mrf.mxu0
        %v1962 = vadd.f32 %v1784, %v1961
        %v1963 = vpop.f32.mrf.mxu0
        %v1964 = vadd.f32 %v1784, %v1963
        %1965 = vdwg.mxu0
        %1966 = vmatpush.bf16.msra.mxu0 %v1917
        %1967 = vmatpush.bf16.msra.mxu0 %v1913
        %1968 = vmatpush.bf16.msra.mxu0 %v1909
        %1969 = vmatpush.bf16.msra.mxu0 %v1905
        %1970 = vmatpush.bf16.msra.mxu0 %v1901
        %1971 = vmatpush.bf16.msra.mxu0 %v1897
        %1972 = vmatpush.bf16.msra.mxu0 %v1893
        %1973 = vmatpush.bf16.msra.mxu0 %v1889
        %1974 = vmatmul.bf16.gmra.mxu0 %v1749
        %v1975 = vpop.f32.mrf.mxu0
        %v1976 = vadd.f32 %v1785, %v1975
        %v1977 = vpop.f32.mrf.mxu0
        %v1978 = vadd.f32 %v1785, %v1977
        %1979 = vdwg.mxu0
        %1980 = vmatpush.bf16.msra.mxu0 %v1918
        %1981 = vmatpush.bf16.msra.mxu0 %v1914
        %1982 = vmatpush.bf16.msra.mxu0 %v1910
        %1983 = vmatpush.bf16.msra.mxu0 %v1906
        %1984 = vmatpush.bf16.msra.mxu0 %v1902
        %1985 = vmatpush.bf16.msra.mxu0 %v1898
        %1986 = vmatpush.bf16.msra.mxu0 %v1894
        %1987 = vmatpush.bf16.msra.mxu0 %v1890
        %1988 = vmatmul.bf16.gmra.mxu0 %v1749
        %v1989 = vpop.f32.mrf.mxu0
        %v1990 = vadd.f32 %v1786, %v1989
        %v1991 = vpop.f32.mrf.mxu0
        %v1992 = vadd.f32 %v1786, %v1991
        %1993 = vdwg.mxu0
        %1994 = vmatpush.bf16.msra.mxu0 %v1919
        %1995 = vmatpush.bf16.msra.mxu0 %v1915
        %1996 = vmatpush.bf16.msra.mxu0 %v1911
        %1997 = vmatpush.bf16.msra.mxu0 %v1907
        %1998 = vmatpush.bf16.msra.mxu0 %v1903
        %1999 = vmatpush.bf16.msra.mxu0 %v1899
        %2000 = vmatpush.bf16.msra.mxu0 %v1895
        %2001 = vmatpush.bf16.msra.mxu0 %v1891
        %2002 = vmatmul.bf16.gmra.mxu0 %v1749
        %v2003 = vpop.f32.mrf.mxu0
        %v2004 = vadd.f32 %v1787, %v2003
        %v2005 = vpop.f32.mrf.mxu0
        %v2006 = vadd.f32 %v1787, %v2005
        %2007 = vdwg.mxu0
        %v2008 = vmul.f32 %v1962, 0.5
        %v2009 = vmul.f32 %v1976, 0.5
        %v2010 = vmul.f32 %v1990, 0.5
        %v2011 = vmul.f32 %v2004, 0.5
        %v2012 = vmul.f32 %v1964, 0.5
        %v2013 = vmul.f32 %v1978, 0.5
        %v2014 = vmul.f32 %v1992, 0.5
        %v2015 = vmul.f32 %v2006, 0.5
        %v2016 = vmul.f32 %v1962, 0.044715
        %v2017 = vmul.f32 %v1976, 0.044715
        %v2018 = vmul.f32 %v1990, 0.044715
        %v2019 = vmul.f32 %v2004, 0.044715
        %v2020 = vmul.f32 %v1964, 0.044715
        %v2021 = vmul.f32 %v1978, 0.044715
        %v2022 = vmul.f32 %v1992, 0.044715
        %v2023 = vmul.f32 %v2006, 0.044715
        %v2024 = vmul.f32 %v2016, %v1962
        %v2025 = vmul.f32 %v2017, %v1976
        %v2026 = vmul.f32 %v2018, %v1990
        %v2027 = vmul.f32 %v2019, %v2004
        %v2028 = vmul.f32 %v2020, %v1964
        %v2029 = vmul.f32 %v2021, %v1978
        %v2030 = vmul.f32 %v2022, %v1992
        %v2031 = vmul.f32 %v2023, %v2006
        %v2032 = vmul.f32 %v2024, %v1962
        %v2033 = vmul.f32 %v2025, %v1976
        %v2034 = vmul.f32 %v2026, %v1990
        %v2035 = vmul.f32 %v2027, %v2004
        %v2036 = vmul.f32 %v2028, %v1964
        %v2037 = vmul.f32 %v2029, %v1978
        %v2038 = vmul.f32 %v2030, %v1992
        %v2039 = vmul.f32 %v2031, %v2006
        %v2040 = vadd.f32 %v1962, %v2032
        %v2041 = vadd.f32 %v1976, %v2033
        %v2042 = vadd.f32 %v1990, %v2034
        %v2043 = vadd.f32 %v2004, %v2035
        %v2044 = vadd.f32 %v1964, %v2036
        %v2045 = vadd.f32 %v1978, %v2037
        %v2046 = vadd.f32 %v1992, %v2038
        %v2047 = vadd.f32 %v2006, %v2039
        %v2048 = vmul.f32 %v2040, 0.7978846
        %v2049 = vmul.f32 %v2041, 0.7978846
        %v2050 = vmul.f32 %v2042, 0.7978846
        %v2051 = vmul.f32 %v2043, 0.7978846
        %v2052 = vmul.f32 %v2044, 0.7978846
        %v2053 = vmul.f32 %v2045, 0.7978846
        %v2054 = vmul.f32 %v2046, 0.7978846
        %v2055 = vmul.f32 %v2047, 0.7978846
        %v2056 = vtanh.pop %v2048
        %v2057 = vtanh.pop %v2049
        %v2058 = vtanh.pop %v2050
        %v2059 = vtanh.pop %v2051
        %v2060 = vtanh.pop %v2052
        %v2061 = vtanh.pop %v2053
        %v2062 = vtanh.pop %v2054
        %v2063 = vtanh.pop %v2055
        %v2064 = vadd.f32 %v2056, 1.0
        %v2065 = vadd.f32 %v2057, 1.0
        %v2066 = vadd.f32 %v2058, 1.0
        %v2067 = vadd.f32 %v2059, 1.0
        %v2068 = vadd.f32 %v2060, 1.0
        %v2069 = vadd.f32 %v2061, 1.0
        %v2070 = vadd.f32 %v2062, 1.0
        %v2071 = vadd.f32 %v2063, 1.0
        %v2072 = vmul.f32 %v2008, %v2064
        %v2073 = vmul.f32 %v2009, %v2065
        %v2074 = vmul.f32 %v2010, %v2066
        %v2075 = vmul.f32 %v2011, %v2067
        %v2076 = vmul.f32 %v2012, %v2068
        %v2077 = vmul.f32 %v2013, %v2069
        %v2078 = vmul.f32 %v2014, %v2070
        %v2079 = vmul.f32 %v2015, %v2071
        %v2080 = vpack.c.bf16 %v2076, %v2072
        %v2081 = vpack.c.bf16 %v2077, %v2073
        %v2082 = vpack.c.bf16 %v2078, %v2074
        %v2083 = vpack.c.bf16 %v2079, %v2075
        %v2084 = vld [vmem:[%s706] sm:$0xf]
        %v2085 = vld [vmem:[%s706 + $0x4] sm:$0xf]
        %v2086 = vld [vmem:[%s706 + $0x8] sm:$0xf]
        %v2087 = vld [vmem:[%s706 + $0xc] sm:$0xf]
        %v2088 = vld [vmem:[%s706 + $0x10] sm:$0xf]
        %v2089 = vld [vmem:[%s706 + $0x14] sm:$0xf]
        %v2090 = vld [vmem:[%s706 + $0x18] sm:$0xf]
        %v2091 = vld [vmem:[%s706 + $0x1c] sm:$0xf]
        %v2092 = vld [vmem:[%s706 + $0x20] sm:$0xf]
        %v2093 = vld [vmem:[%s706 + $0x24] sm:$0xf]
        %v2094 = vld [vmem:[%s706 + $0x28] sm:$0xf]
        %v2095 = vld [vmem:[%s706 + $0x2c] sm:$0xf]
        %v2096 = vld [vmem:[%s706 + $0x30] sm:$0xf]
        %v2097 = vld [vmem:[%s706 + $0x34] sm:$0xf]
        %v2098 = vld [vmem:[%s706 + $0x38] sm:$0xf]
        %v2099 = vld [vmem:[%s706 + $0x3c] sm:$0xf]
        %v2100 = vld [vmem:[%s706 + $0x40] sm:$0xf]
        %v2101 = vld [vmem:[%s706 + $0x44] sm:$0xf]
        %v2102 = vld [vmem:[%s706 + $0x48] sm:$0xf]
        %v2103 = vld [vmem:[%s706 + $0x4c] sm:$0xf]
        %v2104 = vld [vmem:[%s706 + $0x50] sm:$0xf]
        %v2105 = vld [vmem:[%s706 + $0x54] sm:$0xf]
        %v2106 = vld [vmem:[%s706 + $0x58] sm:$0xf]
        %v2107 = vld [vmem:[%s706 + $0x5c] sm:$0xf]
        %v2108 = vld [vmem:[%s706 + $0x60] sm:$0xf]
        %v2109 = vld [vmem:[%s706 + $0x64] sm:$0xf]
        %v2110 = vld [vmem:[%s706 + $0x68] sm:$0xf]
        %v2111 = vld [vmem:[%s706 + $0x6c] sm:$0xf]
        %v2112 = vld [vmem:[%s706 + $0x70] sm:$0xf]
        %v2113 = vld [vmem:[%s706 + $0x74] sm:$0xf]
        %v2114 = vld [vmem:[%s706 + $0x78] sm:$0xf]
        %v2115 = vld [vmem:[%s706 + $0x7c] sm:$0xf]
        %v2116 = vld [vmem:[%s706 + $0x80] sm:$0xf]
        %v2117 = vld [vmem:[%s706 + $0x84] sm:$0xf]
        %v2118 = vld [vmem:[%s706 + $0x88] sm:$0xf]
        %v2119 = vld [vmem:[%s706 + $0x8c] sm:$0xf]
        %v2120 = vld [vmem:[%s706 + $0x90] sm:$0xf]
        %v2121 = vld [vmem:[%s706 + $0x94] sm:$0xf]
        %v2122 = vld [vmem:[%s706 + $0x98] sm:$0xf]
        %v2123 = vld [vmem:[%s706 + $0x9c] sm:$0xf]
        %v2124 = vld [vmem:[%s706 + $0xa0] sm:$0xf]
        %v2125 = vld [vmem:[%s706 + $0xa4] sm:$0xf]
        %v2126 = vld [vmem:[%s706 + $0xa8] sm:$0xf]
        %v2127 = vld [vmem:[%s706 + $0xac] sm:$0xf]
        %v2128 = vld [vmem:[%s706 + $0xb0] sm:$0xf]
        %v2129 = vld [vmem:[%s706 + $0xb4] sm:$0xf]
        %v2130 = vld [vmem:[%s706 + $0xb8] sm:$0xf]
        %v2131 = vld [vmem:[%s706 + $0xbc] sm:$0xf]
        %v2132 = vld [vmem:[%s706 + $0xc0] sm:$0xf]
        %v2133 = vld [vmem:[%s706 + $0xc4] sm:$0xf]
        %v2134 = vld [vmem:[%s706 + $0xc8] sm:$0xf]
        %v2135 = vld [vmem:[%s706 + $0xcc] sm:$0xf]
        %v2136 = vld [vmem:[%s706 + $0xd0] sm:$0xf]
        %v2137 = vld [vmem:[%s706 + $0xd4] sm:$0xf]
        %v2138 = vld [vmem:[%s706 + $0xd8] sm:$0xf]
        %v2139 = vld [vmem:[%s706 + $0xdc] sm:$0xf]
        %v2140 = vld [vmem:[%s706 + $0xe0] sm:$0xf]
        %v2141 = vld [vmem:[%s706 + $0xe4] sm:$0xf]
        %v2142 = vld [vmem:[%s706 + $0xe8] sm:$0xf]
        %v2143 = vld [vmem:[%s706 + $0xec] sm:$0xf]
        %v2144 = vld [vmem:[%s706 + $0xf0] sm:$0xf]
        %v2145 = vld [vmem:[%s706 + $0xf4] sm:$0xf]
        %v2146 = vld [vmem:[%s706 + $0xf8] sm:$0xf]
        %v2147 = vld [vmem:[%s706 + $0xfc] sm:$0xf]
        %v2148 = vld [vmem:[%s850] sm:$0x1]
        %v2150 = vperm.slane %v2148, 0
        %v2216 = vunpack.c.l.b16 %v2084
        %v2217 = vunpack.c.l.b16 %v2085
        %v2218 = vunpack.c.l.b16 %v2086
        %v2219 = vunpack.c.l.b16 %v2087
        %v2220 = vunpack.c.l.b16 %v2088
        %v2221 = vunpack.c.l.b16 %v2089
        %v2222 = vunpack.c.l.b16 %v2090
        %v2223 = vunpack.c.l.b16 %v2091
        %v2224 = vunpack.c.l.b16 %v2092
        %v2225 = vunpack.c.l.b16 %v2093
        %v2226 = vunpack.c.l.b16 %v2094
        %v2227 = vunpack.c.l.b16 %v2095
        %v2228 = vunpack.c.l.b16 %v2096
        %v2229 = vunpack.c.l.b16 %v2097
        %v2230 = vunpack.c.l.b16 %v2098
        %v2231 = vunpack.c.l.b16 %v2099
        %v2232 = vunpack.c.l.b16 %v2100
        %v2233 = vunpack.c.l.b16 %v2101
        %v2234 = vunpack.c.l.b16 %v2102
        %v2235 = vunpack.c.l.b16 %v2103
        %v2236 = vunpack.c.l.b16 %v2104
        %v2237 = vunpack.c.l.b16 %v2105
        %v2238 = vunpack.c.l.b16 %v2106
        %v2239 = vunpack.c.l.b16 %v2107
        %v2240 = vunpack.c.l.b16 %v2108
        %v2241 = vunpack.c.l.b16 %v2109
        %v2242 = vunpack.c.l.b16 %v2110
        %v2243 = vunpack.c.l.b16 %v2111
        %v2244 = vunpack.c.l.b16 %v2112
        %v2245 = vunpack.c.l.b16 %v2113
        %v2246 = vunpack.c.l.b16 %v2114
        %v2247 = vunpack.c.l.b16 %v2115
        %v2248 = vunpack.c.l.b16 %v2116
        %v2249 = vunpack.c.l.b16 %v2117
        %v2250 = vunpack.c.l.b16 %v2118
        %v2251 = vunpack.c.l.b16 %v2119
        %v2252 = vunpack.c.l.b16 %v2120
        %v2253 = vunpack.c.l.b16 %v2121
        %v2254 = vunpack.c.l.b16 %v2122
        %v2255 = vunpack.c.l.b16 %v2123
        %v2256 = vunpack.c.l.b16 %v2124
        %v2257 = vunpack.c.l.b16 %v2125
        %v2258 = vunpack.c.l.b16 %v2126
        %v2259 = vunpack.c.l.b16 %v2127
        %v2260 = vunpack.c.l.b16 %v2128
        %v2261 = vunpack.c.l.b16 %v2129
        %v2262 = vunpack.c.l.b16 %v2130
        %v2263 = vunpack.c.l.b16 %v2131
        %v2264 = vunpack.c.l.b16 %v2132
        %v2265 = vunpack.c.l.b16 %v2133
        %v2266 = vunpack.c.l.b16 %v2134
        %v2267 = vunpack.c.l.b16 %v2135
        %v2268 = vunpack.c.l.b16 %v2136
        %v2269 = vunpack.c.l.b16 %v2137
        %v2270 = vunpack.c.l.b16 %v2138
        %v2271 = vunpack.c.l.b16 %v2139
        %v2272 = vunpack.c.l.b16 %v2140
        %v2273 = vunpack.c.l.b16 %v2141
        %v2274 = vunpack.c.l.b16 %v2142
        %v2275 = vunpack.c.l.b16 %v2143
        %v2276 = vunpack.c.l.b16 %v2144
        %v2277 = vunpack.c.l.b16 %v2145
        %v2278 = vunpack.c.l.b16 %v2146
        %v2279 = vunpack.c.l.b16 %v2147
        %v2280 = vpack.c.b16 %v2217, %v2216
        %v2281 = vpack.c.b16 %v2219, %v2218
        %v2282 = vpack.c.b16 %v2221, %v2220
        %v2283 = vpack.c.b16 %v2223, %v2222
        %v2284 = vpack.c.b16 %v2225, %v2224
        %v2285 = vpack.c.b16 %v2227, %v2226
        %v2286 = vpack.c.b16 %v2229, %v2228
        %v2287 = vpack.c.b16 %v2231, %v2230
        %v2288 = vpack.c.b16 %v2233, %v2232
        %v2289 = vpack.c.b16 %v2235, %v2234
        %v2290 = vpack.c.b16 %v2237, %v2236
        %v2291 = vpack.c.b16 %v2239, %v2238
        %v2292 = vpack.c.b16 %v2241, %v2240
        %v2293 = vpack.c.b16 %v2243, %v2242
        %v2294 = vpack.c.b16 %v2245, %v2244
        %v2295 = vpack.c.b16 %v2247, %v2246
        %v2296 = vpack.c.b16 %v2249, %v2248
        %v2297 = vpack.c.b16 %v2251, %v2250
        %v2298 = vpack.c.b16 %v2253, %v2252
        %v2299 = vpack.c.b16 %v2255, %v2254
        %v2300 = vpack.c.b16 %v2257, %v2256
        %v2301 = vpack.c.b16 %v2259, %v2258
        %v2302 = vpack.c.b16 %v2261, %v2260
        %v2303 = vpack.c.b16 %v2263, %v2262
        %v2304 = vpack.c.b16 %v2265, %v2264
        %v2305 = vpack.c.b16 %v2267, %v2266
        %v2306 = vpack.c.b16 %v2269, %v2268
        %v2307 = vpack.c.b16 %v2271, %v2270
        %v2308 = vpack.c.b16 %v2273, %v2272
        %v2309 = vpack.c.b16 %v2275, %v2274
        %v2310 = vpack.c.b16 %v2277, %v2276
        %v2311 = vpack.c.b16 %v2279, %v2278
        %2344 = vmatpush.bf16.msra.mxu0 %v2287
        %2345 = vmatpush.bf16.msra.mxu0 %v2286
        %2346 = vmatpush.bf16.msra.mxu0 %v2285
        %2347 = vmatpush.bf16.msra.mxu0 %v2284
        %2348 = vmatpush.bf16.msra.mxu0 %v2283
        %2349 = vmatpush.bf16.msra.mxu0 %v2282
        %2350 = vmatpush.bf16.msra.mxu0 %v2281
        %2351 = vmatpush.bf16.msra.mxu0 %v2280
        %2352 = vmatmul.bf16.gmra.mxu0 %v2080
        %v2353 = vpop.f32.mrf.mxu0
        %v2354 = vadd.f32 %v2150, %v2353
        %v2355 = vpop.f32.mrf.mxu0
        %v2356 = vadd.f32 %v2150, %v2355
        %2357 = vdwg.mxu0
        %2358 = vmatpush.bf16.msra.mxu0 %v2295
        %2359 = vmatpush.bf16.msra.mxu0 %v2294
        %2360 = vmatpush.bf16.msra.mxu0 %v2293
        %2361 = vmatpush.bf16.msra.mxu0 %v2292
        %2362 = vmatpush.bf16.msra.mxu0 %v2291
        %2363 = vmatpush.bf16.msra.mxu0 %v2290
        %2364 = vmatpush.bf16.msra.mxu0 %v2289
        %2365 = vmatpush.bf16.msra.mxu0 %v2288
        %2366 = vmatmul.bf16.gmra.mxu0 %v2081
        %v2367 = vpop.f32.mrf.mxu0
        %v2368 = vadd.f32 %v2354, %v2367
        %v2369 = vpop.f32.mrf.mxu0
        %v2370 = vadd.f32 %v2356, %v2369
        %2371 = vdwg.mxu0
        %2372 = vmatpush.bf16.msra.mxu0 %v2303
        %2373 = vmatpush.bf16.msra.mxu0 %v2302
        %2374 = vmatpush.bf16.msra.mxu0 %v2301
        %2375 = vmatpush.bf16.msra.mxu0 %v2300
        %2376 = vmatpush.bf16.msra.mxu0 %v2299
        %2377 = vmatpush.bf16.msra.mxu0 %v2298
        %2378 = vmatpush.bf16.msra.mxu0 %v2297
        %2379 = vmatpush.bf16.msra.mxu0 %v2296
        %2380 = vmatmul.bf16.gmra.mxu0 %v2082
        %v2381 = vpop.f32.mrf.mxu0
        %v2382 = vadd.f32 %v2368, %v2381
        %v2383 = vpop.f32.mrf.mxu0
        %v2384 = vadd.f32 %v2370, %v2383
        %2385 = vdwg.mxu0
        %2386 = vmatpush.bf16.msra.mxu0 %v2311
        %2387 = vmatpush.bf16.msra.mxu0 %v2310
        %2388 = vmatpush.bf16.msra.mxu0 %v2309
        %2389 = vmatpush.bf16.msra.mxu0 %v2308
        %2390 = vmatpush.bf16.msra.mxu0 %v2307
        %2391 = vmatpush.bf16.msra.mxu0 %v2306
        %2392 = vmatpush.bf16.msra.mxu0 %v2305
        %2393 = vmatpush.bf16.msra.mxu0 %v2304
        %2394 = vmatmul.bf16.gmra.mxu0 %v2083
        %v2395 = vpop.f32.mrf.mxu0
        %v2396 = vadd.f32 %v2382, %v2395
        %v2397 = vpop.f32.mrf.mxu0
        %v2398 = vadd.f32 %v2384, %v2397
        %2399 = vdwg.mxu0
        %v2400 = vadd.f32 %v1695, %v2396
        %v2401 = vadd.f32 %v1696, %v2398
        %2402 = vst [vmem:[#allocation2] sm:$0xff] %v2400
        %2403 = vst [vmem:[#allocation2 + $0x8] sm:$0xff] %v2401
        %p2404 = scmp.eq.s32.totalorder %s43, 1
        // Predicated region
        $region109: #{sonnet_gpt_forward.1} parent=87 // pred_check
          %p2405 = pneg %p2404
        $region110: #{sonnet_gpt_forward.1} parent=87 // pred_check_branch
          %2407 = sbr.rel (%p2405) target = $region112
        $region111: #{sonnet_gpt_forward.1} parent=87 // pred_region
          %v2408 = vld [vmem:[%s14] sm:$0x1]
          %v2409 = vld [vmem:[%s15] sm:$0x1]
          %2410 = vadd.xlane.f32.xlu0 %v2400
          %v2411 = vpop.xlane.xlu0 %2410
          %2412 = vadd.xlane.f32.xlu0 %v2401
          %v2413 = vpop.xlane.xlu0 %2412
          %v2414 = vmul.f32 %v2411, %v874
          %v2415 = vmul.f32 %v2413, %v874
          %v2416 = vsub.f32 %v2400, %v2414
          %v2417 = vsub.f32 %v2401, %v2415
          %v2418 = vmul.f32 %v2416, %v2416
          %v2419 = vmul.f32 %v2417, %v2417
          %2420 = vadd.xlane.f32.xlu0 %v2418
          %v2421 = vpop.xlane.xlu0 %2420
          %2422 = vadd.xlane.f32.xlu0 %v2419
          %v2423 = vpop.xlane.xlu0 %2422
          %v2424 = vmul.f32 %v2421, %v874
          %v2425 = vmul.f32 %v2423, %v874
          %v2426 = vadd.f32 %v2424, 1e-05
          %v2427 = vadd.f32 %v2425, 1e-05
          %v2428 = vrsqrt.pop %v2426
          %v2429 = vmul.f32 %v2428, %v2426
          %v2430 = vmul.f32 %v2429, %v2428
          %v2431 = vmul.f32 0.5, %v2430
          %v2432 = vsub.f32 1.5, %v2431
          %v2433 = vmul.f32 %v2428, %v2432
          %vm2434 = vweird.f32 %v2426
          %vm2435 = vweird.f32 %v2428
          %vm2436 = vmor %vm2434, %vm2435
          %v2437 = vsel %vm2436, %v2428, %v2433
          %v2438 = vrsqrt.pop %v2427
          %v2439 = vmul.f32 %v2438, %v2427
          %v2440 = vmul.f32 %v2439, %v2438
          %v2441 = vmul.f32 0.5, %v2440
          %v2442 = vsub.f32 1.5, %v2441
          %v2443 = vmul.f32 %v2438, %v2442
          %vm2444 = vweird.f32 %v2427
          %vm2445 = vweird.f32 %v2438
          %vm2446 = vmor %vm2444, %vm2445
          %v2447 = vsel %vm2446, %v2438, %v2443
          %v2448 = vmul.f32 %v2416, %v2437
          %v2449 = vmul.f32 %v2417, %v2447
          %v2451 = vperm.slane %v2408, 0
          %v2453 = vmul.f32 %v2448, %v2451
          %v2454 = vmul.f32 %v2449, %v2451
          %v2456 = vperm.slane %v2409, 0
          %v2458 = vadd.f32 %v2453, %v2456
          %v2459 = vadd.f32 %v2454, %v2456
          %v2460 = vpack.c.bf16 %v2459, %v2458
          %v2461 = vld [vmem:[#allocation9] sm:$0xff]
          %v2462 = vld [vmem:[#allocation9 + $0x8] sm:$0xff]
          %v2463 = vld [vmem:[#allocation9 + $0x10] sm:$0xff]
          %v2464 = vld [vmem:[#allocation9 + $0x18] sm:$0xff]
          %v2465 = vld [vmem:[#allocation9 + $0x20] sm:$0xff]
          %v2466 = vld [vmem:[#allocation9 + $0x28] sm:$0xff]
          %v2467 = vld [vmem:[#allocation9 + $0x30] sm:$0xff]
          %v2468 = vld [vmem:[#allocation9 + $0x38] sm:$0xff]
          %v2469 = vld [vmem:[#allocation9 + $0x40] sm:$0xff]
          %v2470 = vld [vmem:[#allocation9 + $0x48] sm:$0xff]
          %v2471 = vld [vmem:[#allocation9 + $0x50] sm:$0xff]
          %v2472 = vld [vmem:[#allocation9 + $0x58] sm:$0xff]
          %v2473 = vld [vmem:[#allocation9 + $0x60] sm:$0xff]
          %v2474 = vld [vmem:[#allocation9 + $0x68] sm:$0xff]
          %v2475 = vld [vmem:[#allocation9 + $0x70] sm:$0xff]
          %v2476 = vld [vmem:[#allocation9 + $0x78] sm:$0xff]
          %v2493 = vunpack.c.l.b16 %v2461
          %v2494 = vunpack.c.h.b16 %v2461
          %v2495 = vunpack.c.l.b16 %v2462
          %v2496 = vunpack.c.h.b16 %v2462
          %v2497 = vunpack.c.l.b16 %v2463
          %v2498 = vunpack.c.h.b16 %v2463
          %v2499 = vunpack.c.l.b16 %v2464
          %v2500 = vunpack.c.h.b16 %v2464
          %v2501 = vunpack.c.l.b16 %v2465
          %v2502 = vunpack.c.h.b16 %v2465
          %v2503 = vunpack.c.l.b16 %v2466
          %v2504 = vunpack.c.h.b16 %v2466
          %v2505 = vunpack.c.l.b16 %v2467
          %v2506 = vunpack.c.h.b16 %v2467
          %v2507 = vunpack.c.l.b16 %v2468
          %v2508 = vunpack.c.h.b16 %v2468
          %v2509 = vunpack.c.l.b16 %v2469
          %v2510 = vunpack.c.h.b16 %v2469
          %v2511 = vunpack.c.l.b16 %v2470
          %v2512 = vunpack.c.h.b16 %v2470
          %v2513 = vunpack.c.l.b16 %v2471
          %v2514 = vunpack.c.h.b16 %v2471
          %v2515 = vunpack.c.l.b16 %v2472
          %v2516 = vunpack.c.h.b16 %v2472
          %v2517 = vunpack.c.l.b16 %v2473
          %v2518 = vunpack.c.h.b16 %v2473
          %v2519 = vunpack.c.l.b16 %v2474
          %v2520 = vunpack.c.h.b16 %v2474
          %v2521 = vunpack.c.l.b16 %v2475
          %v2522 = vunpack.c.h.b16 %v2475
          %v2523 = vunpack.c.l.b16 %v2476
          %v2524 = vunpack.c.h.b16 %v2476
          %v2525 = vpack.c.b16 %v2495, %v2493
          %v2526 = vpack.c.b16 %v2496, %v2494
          %v2527 = vpack.c.b16 %v2499, %v2497
          %v2528 = vpack.c.b16 %v2500, %v2498
          %v2529 = vpack.c.b16 %v2503, %v2501
          %v2530 = vpack.c.b16 %v2504, %v2502
          %v2531 = vpack.c.b16 %v2507, %v2505
          %v2532 = vpack.c.b16 %v2508, %v2506
          %v2533 = vpack.c.b16 %v2511, %v2509
          %v2534 = vpack.c.b16 %v2512, %v2510
          %v2535 = vpack.c.b16 %v2515, %v2513
          %v2536 = vpack.c.b16 %v2516, %v2514
          %v2537 = vpack.c.b16 %v2519, %v2517
          %v2538 = vpack.c.b16 %v2520, %v2518
          %v2539 = vpack.c.b16 %v2523, %v2521
          %v2540 = vpack.c.b16 %v2524, %v2522
          %2557 = vmatpush.bf16.msra.mxu0 %v2539
          %2558 = vmatpush.bf16.msra.mxu0 %v2537
          %2559 = vmatpush.bf16.msra.mxu0 %v2535
          %2560 = vmatpush.bf16.msra.mxu0 %v2533
          %2561 = vmatpush.bf16.msra.mxu0 %v2531
          %2562 = vmatpush.bf16.msra.mxu0 %v2529
          %2563 = vmatpush.bf16.msra.mxu0 %v2527
          %2564 = vmatpush.bf16.msra.mxu0 %v2525
          %2565 = vmatmul.bf16.gmra.mxu0 %v2460
          %v2566 = vpop.f32.mrf.mxu0
          %v2567 = vadd.f32 0.0, %v2566
          %v2568 = vpop.f32.mrf.mxu0
          %v2569 = vadd.f32 0.0, %v2568
          %2570 = vdwg.mxu0
          %2571 = vmatpush.bf16.msra.mxu0 %v2540
          %2572 = vmatpush.bf16.msra.mxu0 %v2538
          %2573 = vmatpush.bf16.msra.mxu0 %v2536
          %2574 = vmatpush.bf16.msra.mxu0 %v2534
          %2575 = vmatpush.bf16.msra.mxu0 %v2532
          %2576 = vmatpush.bf16.msra.mxu0 %v2530
          %2577 = vmatpush.bf16.msra.mxu0 %v2528
          %2578 = vmatpush.bf16.msra.mxu0 %v2526
          %2579 = vmatmul.bf16.gmra.mxu0 %v2460
          %v2580 = vpop.f32.mrf.mxu0
          %v2581 = vadd.f32 0.0, %v2580
          %v2582 = vpop.f32.mrf.mxu0
          %v2583 = vadd.f32 0.0, %v2582
          %2584 = vdwg.mxu0
          %2585 = vst [vmem:[%s811] sm:$0xff] %v2567
          %2586 = vst [vmem:[%s811 + $0x8] sm:$0xff] %v2581
          %2587 = vst [vmem:[%s811 + $0x10] sm:$0xff] %v2569
          %2588 = vst [vmem:[%s811 + $0x18] sm:$0xff] %v2583
        $region112: #{sonnet_gpt_forward.1} parent=87 // pred_fallthru
          _
        %s2589 = sand.u32 %s485, 1
        %s2590 = scalar_lea.sflag [#allocation5], %s2589
        %s2591 = sand.u32 %s485, 1
        %s2592 = smul.addr %s2591, 32
        %s2593 = scalar_lea.vmem [#allocation11], %s2592
        // Predicated region
        $region113: #{sonnet_gpt_forward.1} parent=87 // pred_check
          %p2594 = pneg %p495
        $region114: #{sonnet_gpt_forward.1} parent=87 // pred_check_branch
          %2596 = sbr.rel (%p2594) target = $region116
        $region115: #{sonnet_gpt_forward.1} parent=87 // pred_region
          %2598 = vsyncadd %s2590, 0
          %s2599 = smul.addr %s42, 4
          %s2600 = smul.addr %s2599, 8
          %s2601 = scalar_lea.hbm %s17, %s2600
          %s2602 = sshll.u32 %s2593, 4
          %s2603 = int_to_ptr.vmem [resolvable:$true] %s2602
          %s2604 = sshll.u32 %s2601, 4
          %s2605 = int_to_ptr.hbm [resolvable:$true] %s2604
          %2610 = dma.vmem_to_hbm [thread:$0]  %s2603, 512, %s2605, %s2590, 256, 256, 16
        $region116: #{sonnet_gpt_forward.1} parent=87 // pred_fallthru
          _
      $region88: #{sonnet_gpt_forward.1} parent=5 // pred_fallthru
        _
      %p2611 = scmp.le.s32.totalorder 2, %s33
      // Predicated region
      $region117: #{sonnet_gpt_forward.1} parent=5 // pred_check
        %p2612 = pneg %p2611
      $region118: #{sonnet_gpt_forward.1} parent=5 // pred_check_branch
        %2614 = sbr.rel (%p2612) target = $region120
      $region119: #{sonnet_gpt_forward.1} parent=5 // pred_region
        %s2615 = ssub.s32 %s33, 2
        // Predicated region
        $region121: #{sonnet_gpt_forward.1} parent=119 // pred_check
          %p2616 = pneg %p501
        $region122: #{sonnet_gpt_forward.1} parent=119 // pred_check_branch
          %2618 = sbr.rel (%p2616) target = $region124
        $region123: #{sonnet_gpt_forward.1} parent=119 // pred_region
          %s2619 = sand.u32 %s486, 1
          %s2620 = scalar_lea.sflag [#allocation5], %s2619
          %s2621 = sand.u32 %s486, 1
          %s2622 = smul.addr %s2621, 32
          %s2623 = scalar_lea.vmem [#allocation11], %s2622
          %2625 = dma.done %s2620, 512
        $region124: #{sonnet_gpt_forward.1} parent=119 // pred_fallthru
          _
      $region120: #{sonnet_gpt_forward.1} parent=5 // pred_fallthru
        _
    $region6: #{sonnet_gpt_forward.1} parent=1 // loop_footer
      %s37 = sadd.s32 1, %s33
    $region7: #{sonnet_gpt_forward.1} parent=1 // loop_footer_branch
      %32 = sbr.rel target = $region3
    $region8: #{sonnet_gpt_forward.1} parent=1 // loop_exit
      _
    %2626 = vsyncpa [#allocation4], 1
    %s2627 = scalar_lea.sflag [#allocation4], 1
    %2628 = vsyncpa %s2627, 1
    %2629 = vsyncpa [#allocation7], 1
    %s2630 = scalar_lea.sflag [#allocation7], 1
    %2631 = vsyncpa %s2630, 1
    %2632 = vsyncpa [#allocation10], 1
    %2633 = vsyncpa [#allocation5], 1
    %s2634 = scalar_lea.sflag [#allocation5], 1
    %2635 = vsyncpa %s2634, 1

</llo_original>
